<compile_context>
chip_gen: v7x
topology: tpu7x:2x2x1
jax: 0.10.0
libtpu: 0.0.40
codegen_flags: <defaults>
</compile_context>

<pallas_src>
import jax
import jax.numpy as jnp
from jax.experimental import pallas as pl
from jax.experimental.pallas import tpu as pltpu

# ----------------------------------------------------------------------------
# Model configuration (defaults of ConvNet, but with a small sequence length)
# ----------------------------------------------------------------------------
IN_CHANNELS = 1
IN_LEN = 128                      # small stand-in for 100000
NUM_LAYERS = 5
HIDDEN_DIMS = (4, 8, 16, 32, 64)
CONV_KERNELS = (2,) * NUM_LAYERS
STRIDES = (2,) * NUM_LAYERS
POOL_FACTORS = (2,) * NUM_LAYERS
PADDINGS = (0,) * NUM_LAYERS
NUM_CLASSES = 2
BATCH = 2
BN_EPS = 1e-5
FC_DIMS = (32, 16, NUM_CLASSES)


def _fs(shape):
  """Full-array BlockSpec (block == whole array, grid=(1,))."""
  n = len(shape)
  return pl.BlockSpec(shape, lambda i, n=n: (0,) * n)


def _layer_plan():
  """Static per-layer geometry.  Returns (plan, C_last, L_last)."""
  plan = []
  c, length = IN_CHANNELS, IN_LEN
  for i in range(NUM_LAYERS):
    k, s, p = CONV_KERNELS[i], STRIDES[i], PADDINGS[i]
    co = HIDDEN_DIMS[i]
    l_pool = int(length / POOL_FACTORS[i])          # PyTorch: int(in_dim/pool)
    l_conv = (length + 2 * p - k) // s + 1
    # Fused fast path requires: no padding and s*l_conv == L so a strided read
    # over the fused (batch*length) axis never crosses a batch boundary, and a
    # uniform pooling window.
    # TODO(synk): general AdaptiveAvgPool1d (non-divisible windows), padding>0
    # or stride != kernel would need a per-batch (B, L, C) scratch layout.
    assert p == 0 and s * l_conv == length, "unsupported conv geometry"
    assert l_conv % l_pool == 0, "non-uniform adaptive pooling not supported"
    plan.append(dict(ci=c, co=co, k=k, s=s, l_conv=l_conv, l_pool=l_pool))
    c, length = co, l_pool
  return plan, c, length


# ----------------------------------------------------------------------------
# The single fused kernel
# ----------------------------------------------------------------------------
def _make_kernel(plan, batch, c_last, l_last):
  n_layers = len(plan)
  d1, d2, d3 = FC_DIMS

  def kernel(*refs):
    x_ref = refs[0]
    conv_w = refs[1:1 + n_layers]                       # (K, Ci, Co) each
    conv_bgb = refs[1 + n_layers:1 + 2 * n_layers]      # (3, Co) each
    w1_ref = refs[1 + 2 * n_layers]                     # (L_last, C_last, 32)
    w2_ref = refs[2 + 2 * n_layers]                     # (32, 16)
    w3_ref = refs[3 + 2 * n_layers]                     # (16, num_classes)
    fb_ref = refs[4 + 2 * n_layers]                     # (3, 32) packed fc biases
    o_ref = refs[5 + 2 * n_layers]                      # (batch, num_classes)
    scratch = refs[6 + 2 * n_layers:]                   # per-layer VMEM scratch

    # ---- conv stages, activations in length-major (B*L, C) layout ----------
    src = x_ref
    for li, cfg in enumerate(plan):
      k, s = cfg['k'], cfg['s']
      l_conv, l_pool, co = cfg['l_conv'], cfg['l_pool'], cfg['co']
      n_rows = batch * l_conv

      # conv1d = sum over taps of (B*l_conv, Ci) @ (Ci, Co); the tap is an
      # in-kernel im2col via a sublane-strided read of the previous activation.
      acc = None
      for kk in range(k):
        tap = src[pl.ds(kk, n_rows, stride=s), :]       # (B*l_conv, Ci)
        w_kk = conv_w[li][kk]                           # (Ci, Co)
        if tap.shape[1] == 1:                           # Ci==1: outer product
          contrib = tap * w_kk
        else:
          contrib = jnp.dot(tap, w_kk, preferred_element_type=jnp.float32)
        acc = contrib if acc is None else acc + contrib

      bgb = conv_bgb[li][...]                           # (3, Co): bias/gamma/beta
      y = acc + bgb[0:1, :]                             # conv bias

      # AdaptiveAvgPool1d: identity at this config (skipped at trace time);
      # uniform-window mean otherwise.
      if l_conv != l_pool:
        win = l_conv // l_pool
        y = jnp.mean(y.reshape(batch * l_pool, win, co), axis=1)

      # BatchNorm1d (training-mode batch statistics, biased variance) + ReLU
      mean = jnp.mean(y, axis=0, keepdims=True)
      var = jnp.mean(jnp.square(y - mean), axis=0, keepdims=True)
      yhat = (y - mean) * jax.lax.rsqrt(var + BN_EPS)
      out = jnp.maximum(bgb[1:2, :] * yhat + bgb[2:3, :], 0.0)

      scratch[li][...] = out                            # stays in VMEM
      src = scratch[li]

    # ---- MLP head; flatten(start_dim=1) folded into the regrouped fc0 weight
    fb = fb_ref[...]
    h1 = None
    for pos in range(l_last):
      a_pos = src[pl.ds(pos, batch, stride=l_last), :]  # (B, C_last)
      term = jnp.dot(a_pos, w1_ref[pos], preferred_element_type=jnp.float32)
      h1 = term if h1 is None else h1 + term
    h1 = jnp.maximum(h1 + fb[0:1, :d1], 0.0)
    h2 = jnp.maximum(
        jnp.dot(h1, w2_ref[...], preferred_element_type=jnp.float32)
        + fb[1:2, :d2], 0.0)
    o_ref[...] = (jnp.dot(h2, w3_ref[...], preferred_element_type=jnp.float32)
                  + fb[2:3, :d3])

  return kernel


def _prepare_inputs(x, params, plan, c_last, l_last):
  """Host-side (trace-time) weight re-arrangement + boundary layout change."""
  bsz, ci, length = x.shape
  # NCL -> length-major (B*L, Ci): the ONLY layout conversion, at the boundary.
  x_lm = x.transpose(0, 2, 1).reshape(bsz * length, ci)

  conv_ws, conv_bgbs = [], []
  for li in range(len(plan)):
    w, b = params['conv'][li]
    g, bt = params['bn'][li]
    conv_ws.append(w.transpose(2, 1, 0))                 # (K, Ci, Co)
    conv_bgbs.append(jnp.stack([b, g, bt], axis=0))      # (3, Co) packed

  (w1, b1), (w2, b2), (w3, b3) = params['fc']
  assert w1.shape[1] == c_last * l_last
  # w1h[l, c, o] = w1[o, c*L_last + l]  — folds flatten(start_dim=1)
  w1h = w1.reshape(w1.shape[0], c_last, l_last).transpose(2, 1, 0)
  w2t, w3t = w2.T, w3.T                                  # (in, out)
  nb = max(FC_DIMS)
  fb = jnp.zeros((3, nb), jnp.float32)
  fb = fb.at[0, :b1.shape[0]].set(b1)
  fb = fb.at[1, :b2.shape[0]].set(b2)
  fb = fb.at[2, :b3.shape[0]].set(b3)
  return x_lm, conv_ws, conv_bgbs, w1h, w2t, w3t, fb


# ----------------------------------------------------------------------------
# Parameter init (deterministic, PyTorch-default-style uniform(+/-1/sqrt(fan_in)))
# ----------------------------------------------------------------------------
def init_params(key):
  params = {'conv': [], 'bn': [], 'fc': []}
  c, length = IN_CHANNELS, IN_LEN
  for lyr in range(NUM_LAYERS):
    length = int(length / POOL_FACTORS[lyr])
    co, k = HIDDEN_DIMS[lyr], CONV_KERNELS[lyr]
    key, kw, kb = jax.random.split(key, 3)
    bound = 1.0 / (c * k) ** 0.5
    w = jax.random.uniform(kw, (co, c, k), jnp.float32, -bound, bound)
    b = jax.random.uniform(kb, (co,), jnp.float32, -bound, bound)
    params['conv'].append((w, b))
    params['bn'].append((jnp.ones((co,), jnp.float32),
                         jnp.zeros((co,), jnp.float32)))
    c = co
  flat_dim = length * HIDDEN_DIMS[-1]
  for fi, fo in [(flat_dim, FC_DIMS[0]), (FC_DIMS[0], FC_DIMS[1]),
                 (FC_DIMS[1], FC_DIMS[2])]:
    key, kw, kb = jax.random.split(key, 3)
    bound = 1.0 / fi ** 0.5
    w = jax.random.uniform(kw, (fo, fi), jnp.float32, -bound, bound)
    b = jax.random.uniform(kb, (fo,), jnp.float32, -bound, bound)
    params['fc'].append((w, b))
  return params


# ----------------------------------------------------------------------------
# Forward passes
# ----------------------------------------------------------------------------
@jax.jit
def convnet_forward(x, params):
  """x: (B, C_in, L) NCL float32 -> (B, NUM_CLASSES)."""
  plan, c_last, l_last = _layer_plan()
  bsz = x.shape[0]
  x_lm, conv_ws, conv_bgbs, w1h, w2t, w3t, fb = _prepare_inputs(
      x, params, plan, c_last, l_last)

  inputs = [x_lm] + conv_ws + conv_bgbs + [w1h, w2t, w3t, fb]
  in_specs = [_fs(a.shape) for a in inputs]
  scratch_shapes = [pltpu.VMEM((bsz * cfg['l_pool'], cfg['co']), jnp.float32)
                    for cfg in plan]

  return pl.pallas_call(
      _make_kernel(plan, bsz, c_last, l_last),
      out_shape=jax.ShapeDtypeStruct((bsz, NUM_CLASSES), jnp.float32),
      grid=(1,),
      in_specs=in_specs,
      out_specs=_fs((bsz, NUM_CLASSES)),
      scratch_shapes=scratch_shapes,
      compiler_params=pltpu.CompilerParams(dimension_semantics=("arbitrary",)),
  )(*inputs)


def _pool_matrix(l_in, l_out, dtype=jnp.float32):
  """(l_in, l_out) matrix M s.t. y @ M == AdaptiveAvgPool1d(l_out)(y).  (ref only)"""
  i = jnp.arange(l_out)
  starts = (i * l_in) // l_out
  ends = ((i + 1) * l_in + l_out - 1) // l_out
  idx = jnp.arange(l_in)
  mask = (idx[None, :] >= starts[:, None]) & (idx[None, :] < ends[:, None])
  counts = (ends - starts).astype(dtype)
  return (mask.astype(dtype) / counts[:, None]).T


@jax.jit
def reference_forward(x, params):
  """Pure-JAX reference (same math, no Pallas) for validation."""
  h = x
  length = IN_LEN
  for lyr in range(NUM_LAYERS):
    length = int(length / POOL_FACTORS[lyr])
    w, b = params['conv'][lyr]
    g, bt = params['bn'][lyr]
    h = jax.lax.conv_general_dilated(
        h, w, (STRIDES[lyr],), [(PADDINGS[lyr], PADDINGS[lyr])],
        dimension_numbers=('NCH', 'OIH', 'NCH'))
    h = h + b[None, :, None]
    h = jnp.einsum('bcl,lp->bcp', h, _pool_matrix(h.shape[-1], length))
    mean = h.mean(axis=(0, 2), keepdims=True)
    var = jnp.square(h - mean).mean(axis=(0, 2), keepdims=True)
    h = (h - mean) * jax.lax.rsqrt(var + BN_EPS)
    h = h * g[None, :, None] + bt[None, :, None]
    h = jnp.maximum(h, 0.0)
  h = h.reshape(h.shape[0], -1)
  for i, (w, b) in enumerate(params['fc']):
    h = h @ w.T + b
    if i < 2:
      h = jnp.maximum(h, 0.0)
  return h


if __name__ == "__main__":
  key = jax.random.PRNGKey(0)
  key, kx = jax.random.split(key)
  x = jax.random.normal(kx, (BATCH, IN_CHANNELS, IN_LEN), jnp.float32)
  params = init_params(key)

  out = jax.block_until_ready(convnet_forward(x, params))
  ref = jax.block_until_ready(reference_forward(x, params))

  assert out.shape == (BATCH, NUM_CLASSES), out.shape
  assert bool(jnp.all(jnp.isfinite(out)))
  assert bool(jnp.allclose(out, ref, rtol=1e-3, atol=1e-3)), (out, ref)

  print("KERNEL_OK")
</pallas_src>

<mosaic_0001>
module attributes {stable_mosaic.version = 11 : i64} {
  func.func @kernel(%arg0: i32, %arg1: memref<256x1xf32, #tpu.memory_space<vmem>>, %arg2: memref<2x1x4xf32, #tpu.memory_space<vmem>>, %arg3: memref<2x4x8xf32, #tpu.memory_space<vmem>>, %arg4: memref<2x8x16xf32, #tpu.memory_space<vmem>>, %arg5: memref<2x16x32xf32, #tpu.memory_space<vmem>>, %arg6: memref<2x32x64xf32, #tpu.memory_space<vmem>>, %arg7: memref<3x4xf32, #tpu.memory_space<vmem>>, %arg8: memref<3x8xf32, #tpu.memory_space<vmem>>, %arg9: memref<3x16xf32, #tpu.memory_space<vmem>>, %arg10: memref<3x32xf32, #tpu.memory_space<vmem>>, %arg11: memref<3x64xf32, #tpu.memory_space<vmem>>, %arg12: memref<4x64x32xf32, #tpu.memory_space<vmem>>, %arg13: memref<32x16xf32, #tpu.memory_space<vmem>>, %arg14: memref<16x2xf32, #tpu.memory_space<vmem>>, %arg15: memref<3x32xf32, #tpu.memory_space<vmem>>, %arg16: memref<2x2xf32, #tpu.memory_space<vmem>>, %arg17: memref<128x4xf32, #tpu.memory_space<vmem>>, %arg18: memref<64x8xf32, #tpu.memory_space<vmem>>, %arg19: memref<32x16xf32, #tpu.memory_space<vmem>>, %arg20: memref<16x32xf32, #tpu.memory_space<vmem>>, %arg21: memref<8x64xf32, #tpu.memory_space<vmem>>) attributes {dimension_semantics = [#tpu.dimension_semantics<arbitrary>], iteration_bounds = array<i64: 1>, scalar_prefetch = 0 : i64, scratch_operands = 5 : i64, tpu.core_type = #tpu.core_type<tc>, window_params = [{pipeline_mode = #tpu.pipeline_mode<synchronous>, transform_indices = @transform_0, window_bounds = array<i64: 256, 1>}, {pipeline_mode = #tpu.pipeline_mode<synchronous>, transform_indices = @transform_1, window_bounds = array<i64: 2, 1, 4>}, {pipeline_mode = #tpu.pipeline_mode<synchronous>, transform_indices = @transform_2, window_bounds = array<i64: 2, 4, 8>}, {pipeline_mode = #tpu.pipeline_mode<synchronous>, transform_indices = @transform_3, window_bounds = array<i64: 2, 8, 16>}, {pipeline_mode = #tpu.pipeline_mode<synchronous>, transform_indices = @transform_4, window_bounds = array<i64: 2, 16, 32>}, {pipeline_mode = #tpu.pipeline_mode<synchronous>, transform_indices = @transform_5, window_bounds = array<i64: 2, 32, 64>}, {pipeline_mode = #tpu.pipeline_mode<synchronous>, transform_indices = @transform_6, window_bounds = array<i64: 3, 4>}, {pipeline_mode = #tpu.pipeline_mode<synchronous>, transform_indices = @transform_7, window_bounds = array<i64: 3, 8>}, {pipeline_mode = #tpu.pipeline_mode<synchronous>, transform_indices = @transform_8, window_bounds = array<i64: 3, 16>}, {pipeline_mode = #tpu.pipeline_mode<synchronous>, transform_indices = @transform_9, window_bounds = array<i64: 3, 32>}, {pipeline_mode = #tpu.pipeline_mode<synchronous>, transform_indices = @transform_10, window_bounds = array<i64: 3, 64>}, {pipeline_mode = #tpu.pipeline_mode<synchronous>, transform_indices = @transform_11, window_bounds = array<i64: 4, 64, 32>}, {pipeline_mode = #tpu.pipeline_mode<synchronous>, transform_indices = @transform_12, window_bounds = array<i64: 32, 16>}, {pipeline_mode = #tpu.pipeline_mode<synchronous>, transform_indices = @transform_13, window_bounds = array<i64: 16, 2>}, {pipeline_mode = #tpu.pipeline_mode<synchronous>, transform_indices = @transform_14, window_bounds = array<i64: 3, 32>}, {pipeline_mode = #tpu.pipeline_mode<synchronous>, transform_indices = @transform_15, window_bounds = array<i64: 2, 2>}]} {
    %c0 = arith.constant 0 : index
    %c0_0 = arith.constant 0 : index
    %0 = tpu.strided_load %arg1[%c0, %c0_0] {strides = array<i32: 2, 1>} : memref<256x1xf32, #tpu.memory_space<vmem>>, vector<128x1xf32>
    %c0_1 = arith.constant 0 : index
    %c0_2 = arith.constant 0 : index
    %c0_3 = arith.constant 0 : index
    %1 = vector.load %arg2[%c0_1, %c0_2, %c0_3] : memref<2x1x4xf32, #tpu.memory_space<vmem>>, vector<1x1x4xf32>
    %2 = vector.shape_cast %1 : vector<1x1x4xf32> to vector<1x4xf32>
    %3 = vector.broadcast %0 : vector<128x1xf32> to vector<128x4xf32>
    %4 = vector.broadcast %2 : vector<1x4xf32> to vector<128x4xf32>
    %5 = arith.mulf %3, %4 : vector<128x4xf32>
    %c1 = arith.constant 1 : index
    %c0_4 = arith.constant 0 : index
    %6 = tpu.strided_load %arg1[%c1, %c0_4] {strides = array<i32: 2, 1>} : memref<256x1xf32, #tpu.memory_space<vmem>>, vector<128x1xf32>
    %c1_5 = arith.constant 1 : index
    %c0_6 = arith.constant 0 : index
    %c0_7 = arith.constant 0 : index
    %7 = vector.load %arg2[%c1_5, %c0_6, %c0_7] : memref<2x1x4xf32, #tpu.memory_space<vmem>>, vector<1x1x4xf32>
    %8 = vector.shape_cast %7 : vector<1x1x4xf32> to vector<1x4xf32>
    %9 = vector.broadcast %6 : vector<128x1xf32> to vector<128x4xf32>
    %10 = vector.broadcast %8 : vector<1x4xf32> to vector<128x4xf32>
    %11 = arith.mulf %9, %10 : vector<128x4xf32>
    %12 = arith.addf %5, %11 : vector<128x4xf32>
    %c0_8 = arith.constant 0 : index
    %c0_9 = arith.constant 0 : index
    %13 = vector.load %arg7[%c0_8, %c0_9] : memref<3x4xf32, #tpu.memory_space<vmem>>, vector<3x4xf32>
    %14 = vector.extract_strided_slice %13 {offsets = [0, 0], sizes = [1, 4], strides = [1, 1]} : vector<3x4xf32> to vector<1x4xf32>
    %15 = vector.broadcast %14 : vector<1x4xf32> to vector<128x4xf32>
    %16 = arith.addf %12, %15 : vector<128x4xf32>
    %cst = arith.constant dense<0.000000e+00> : vector<4xf32>
    %17 = vector.multi_reduction <add>, %16, %cst [0] : vector<128x4xf32> to vector<4xf32>
    %18 = vector.shape_cast %17 : vector<4xf32> to vector<1x4xf32>
    %cst_10 = arith.constant 1.280000e+02 : f32
    %19 = vector.broadcast %cst_10 : f32 to vector<1x4xf32>
    %20 = arith.divf %18, %19 : vector<1x4xf32>
    %21 = vector.broadcast %20 : vector<1x4xf32> to vector<128x4xf32>
    %22 = arith.subf %16, %21 : vector<128x4xf32>
    %23 = arith.mulf %22, %22 : vector<128x4xf32>
    %cst_11 = arith.constant dense<0.000000e+00> : vector<4xf32>
    %24 = vector.multi_reduction <add>, %23, %cst_11 [0] : vector<128x4xf32> to vector<4xf32>
    %25 = vector.shape_cast %24 : vector<4xf32> to vector<1x4xf32>
    %cst_12 = arith.constant 1.280000e+02 : f32
    %26 = vector.broadcast %cst_12 : f32 to vector<1x4xf32>
    %27 = arith.divf %25, %26 : vector<1x4xf32>
    %28 = vector.broadcast %20 : vector<1x4xf32> to vector<128x4xf32>
    %29 = arith.subf %16, %28 : vector<128x4xf32>
    %cst_13 = arith.constant 9.99999974E-6 : f32
    %30 = vector.broadcast %cst_13 : f32 to vector<1x4xf32>
    %31 = arith.addf %27, %30 : vector<1x4xf32>
    %32 = math.rsqrt %31 : vector<1x4xf32>
    %33 = vector.broadcast %32 : vector<1x4xf32> to vector<128x4xf32>
    %34 = arith.mulf %29, %33 : vector<128x4xf32>
    %35 = vector.extract_strided_slice %13 {offsets = [1, 0], sizes = [1, 4], strides = [1, 1]} : vector<3x4xf32> to vector<1x4xf32>
    %36 = vector.broadcast %35 : vector<1x4xf32> to vector<128x4xf32>
    %37 = arith.mulf %36, %34 : vector<128x4xf32>
    %38 = vector.extract_strided_slice %13 {offsets = [2, 0], sizes = [1, 4], strides = [1, 1]} : vector<3x4xf32> to vector<1x4xf32>
    %39 = vector.broadcast %38 : vector<1x4xf32> to vector<128x4xf32>
    %40 = arith.addf %37, %39 : vector<128x4xf32>
    %cst_14 = arith.constant 0.000000e+00 : f32
    %41 = vector.broadcast %cst_14 : f32 to vector<128x4xf32>
    %42 = arith.maximumf %40, %41 : vector<128x4xf32>
    %c0_15 = arith.constant 0 : index
    %c0_16 = arith.constant 0 : index
    %43 = vector.load %arg17[%c0_15, %c0_16] : memref<128x4xf32, #tpu.memory_space<vmem>>, vector<128x4xf32>
    tpu.vector_store %arg17[%c0_15, %c0_16], %42 {strides = array<i32>} : memref<128x4xf32, #tpu.memory_space<vmem>>, vector<128x4xf32>,
    %c0_17 = arith.constant 0 : index
    %c0_18 = arith.constant 0 : index
    %44 = tpu.strided_load %arg17[%c0_17, %c0_18] {strides = array<i32: 2, 1>} : memref<128x4xf32, #tpu.memory_space<vmem>>, vector<64x4xf32>
    %c0_19 = arith.constant 0 : index
    %c0_20 = arith.constant 0 : index
    %c0_21 = arith.constant 0 : index
    %45 = vector.load %arg3[%c0_19, %c0_20, %c0_21] : memref<2x4x8xf32, #tpu.memory_space<vmem>>, vector<1x4x8xf32>
    %46 = vector.shape_cast %45 : vector<1x4x8xf32> to vector<4x8xf32>
    %cst_22 = arith.constant dense<0.000000e+00> : vector<64x8xf32>
    %47 = tpu.matmul %44, %46, %cst_22 {dimension_numbers = #tpu.dot_dimension_numbers<[1], [0], [0], [1], [0, 0, 1, 1], [], []>} : vector<64x4xf32>, vector<4x8xf32>, vector<64x8xf32> -> vector<64x8xf32>
    %c1_23 = arith.constant 1 : index
    %c0_24 = arith.constant 0 : index
    %48 = tpu.strided_load %arg17[%c1_23, %c0_24] {strides = array<i32: 2, 1>} : memref<128x4xf32, #tpu.memory_space<vmem>>, vector<64x4xf32>
    %c1_25 = arith.constant 1 : index
    %c0_26 = arith.constant 0 : index
    %c0_27 = arith.constant 0 : index
    %49 = vector.load %arg3[%c1_25, %c0_26, %c0_27] : memref<2x4x8xf32, #tpu.memory_space<vmem>>, vector<1x4x8xf32>
    %50 = vector.shape_cast %49 : vector<1x4x8xf32> to vector<4x8xf32>
    %cst_28 = arith.constant dense<0.000000e+00> : vector<64x8xf32>
    %51 = tpu.matmul %48, %50, %cst_28 {dimension_numbers = #tpu.dot_dimension_numbers<[1], [0], [0], [1], [0, 0, 1, 1], [], []>} : vector<64x4xf32>, vector<4x8xf32>, vector<64x8xf32> -> vector<64x8xf32>
    %52 = arith.addf %47, %51 : vector<64x8xf32>
    %c0_29 = arith.constant 0 : index
    %c0_30 = arith.constant 0 : index
    %53 = vector.load %arg8[%c0_29, %c0_30] : memref<3x8xf32, #tpu.memory_space<vmem>>, vector<3x8xf32>
    %54 = vector.extract_strided_slice %53 {offsets = [0, 0], sizes = [1, 8], strides = [1, 1]} : vector<3x8xf32> to vector<1x8xf32>
    %55 = vector.broadcast %54 : vector<1x8xf32> to vector<64x8xf32>
    %56 = arith.addf %52, %55 : vector<64x8xf32>
    %cst_31 = arith.constant dense<0.000000e+00> : vector<8xf32>
    %57 = vector.multi_reduction <add>, %56, %cst_31 [0] : vector<64x8xf32> to vector<8xf32>
    %58 = vector.shape_cast %57 : vector<8xf32> to vector<1x8xf32>
    %cst_32 = arith.constant 6.400000e+01 : f32
    %59 = vector.broadcast %cst_32 : f32 to vector<1x8xf32>
    %60 = arith.divf %58, %59 : vector<1x8xf32>
    %61 = vector.broadcast %60 : vector<1x8xf32> to vector<64x8xf32>
    %62 = arith.subf %56, %61 : vector<64x8xf32>
    %63 = arith.mulf %62, %62 : vector<64x8xf32>
    %cst_33 = arith.constant dense<0.000000e+00> : vector<8xf32>
    %64 = vector.multi_reduction <add>, %63, %cst_33 [0] : vector<64x8xf32> to vector<8xf32>
    %65 = vector.shape_cast %64 : vector<8xf32> to vector<1x8xf32>
    %cst_34 = arith.constant 6.400000e+01 : f32
    %66 = vector.broadcast %cst_34 : f32 to vector<1x8xf32>
    %67 = arith.divf %65, %66 : vector<1x8xf32>
    %68 = vector.broadcast %60 : vector<1x8xf32> to vector<64x8xf32>
    %69 = arith.subf %56, %68 : vector<64x8xf32>
    %cst_35 = arith.constant 9.99999974E-6 : f32
    %70 = vector.broadcast %cst_35 : f32 to vector<1x8xf32>
    %71 = arith.addf %67, %70 : vector<1x8xf32>
    %72 = math.rsqrt %71 : vector<1x8xf32>
    %73 = vector.broadcast %72 : vector<1x8xf32> to vector<64x8xf32>
    %74 = arith.mulf %69, %73 : vector<64x8xf32>
    %75 = vector.extract_strided_slice %53 {offsets = [1, 0], sizes = [1, 8], strides = [1, 1]} : vector<3x8xf32> to vector<1x8xf32>
    %76 = vector.broadcast %75 : vector<1x8xf32> to vector<64x8xf32>
    %77 = arith.mulf %76, %74 : vector<64x8xf32>
    %78 = vector.extract_strided_slice %53 {offsets = [2, 0], sizes = [1, 8], strides = [1, 1]} : vector<3x8xf32> to vector<1x8xf32>
    %79 = vector.broadcast %78 : vector<1x8xf32> to vector<64x8xf32>
    %80 = arith.addf %77, %79 : vector<64x8xf32>
    %cst_36 = arith.constant 0.000000e+00 : f32
    %81 = vector.broadcast %cst_36 : f32 to vector<64x8xf32>
    %82 = arith.maximumf %80, %81 : vector<64x8xf32>
    %c0_37 = arith.constant 0 : index
    %c0_38 = arith.constant 0 : index
    %83 = vector.load %arg18[%c0_37, %c0_38] : memref<64x8xf32, #tpu.memory_space<vmem>>, vector<64x8xf32>
    tpu.vector_store %arg18[%c0_37, %c0_38], %82 {strides = array<i32>} : memref<64x8xf32, #tpu.memory_space<vmem>>, vector<64x8xf32>,
    %c0_39 = arith.constant 0 : index
    %c0_40 = arith.constant 0 : index
    %84 = tpu.strided_load %arg18[%c0_39, %c0_40] {strides = array<i32: 2, 1>} : memref<64x8xf32, #tpu.memory_space<vmem>>, vector<32x8xf32>
    %c0_41 = arith.constant 0 : index
    %c0_42 = arith.constant 0 : index
    %c0_43 = arith.constant 0 : index
    %85 = vector.load %arg4[%c0_41, %c0_42, %c0_43] : memref<2x8x16xf32, #tpu.memory_space<vmem>>, vector<1x8x16xf32>
    %86 = vector.shape_cast %85 : vector<1x8x16xf32> to vector<8x16xf32>
    %cst_44 = arith.constant dense<0.000000e+00> : vector<32x16xf32>
    %87 = tpu.matmul %84, %86, %cst_44 {dimension_numbers = #tpu.dot_dimension_numbers<[1], [0], [0], [1], [0, 0, 1, 1], [], []>} : vector<32x8xf32>, vector<8x16xf32>, vector<32x16xf32> -> vector<32x16xf32>
    %c1_45 = arith.constant 1 : index
    %c0_46 = arith.constant 0 : index
    %88 = tpu.strided_load %arg18[%c1_45, %c0_46] {strides = array<i32: 2, 1>} : memref<64x8xf32, #tpu.memory_space<vmem>>, vector<32x8xf32>
    %c1_47 = arith.constant 1 : index
    %c0_48 = arith.constant 0 : index
    %c0_49 = arith.constant 0 : index
    %89 = vector.load %arg4[%c1_47, %c0_48, %c0_49] : memref<2x8x16xf32, #tpu.memory_space<vmem>>, vector<1x8x16xf32>
    %90 = vector.shape_cast %89 : vector<1x8x16xf32> to vector<8x16xf32>
    %cst_50 = arith.constant dense<0.000000e+00> : vector<32x16xf32>
    %91 = tpu.matmul %88, %90, %cst_50 {dimension_numbers = #tpu.dot_dimension_numbers<[1], [0], [0], [1], [0, 0, 1, 1], [], []>} : vector<32x8xf32>, vector<8x16xf32>, vector<32x16xf32> -> vector<32x16xf32>
    %92 = arith.addf %87, %91 : vector<32x16xf32>
    %c0_51 = arith.constant 0 : index
    %c0_52 = arith.constant 0 : index
    %93 = vector.load %arg9[%c0_51, %c0_52] : memref<3x16xf32, #tpu.memory_space<vmem>>, vector<3x16xf32>
    %94 = vector.extract_strided_slice %93 {offsets = [0, 0], sizes = [1, 16], strides = [1, 1]} : vector<3x16xf32> to vector<1x16xf32>
    %95 = vector.broadcast %94 : vector<1x16xf32> to vector<32x16xf32>
    %96 = arith.addf %92, %95 : vector<32x16xf32>
    %cst_53 = arith.constant dense<0.000000e+00> : vector<16xf32>
    %97 = vector.multi_reduction <add>, %96, %cst_53 [0] : vector<32x16xf32> to vector<16xf32>
    %98 = vector.shape_cast %97 : vector<16xf32> to vector<1x16xf32>
    %cst_54 = arith.constant 3.200000e+01 : f32
    %99 = vector.broadcast %cst_54 : f32 to vector<1x16xf32>
    %100 = arith.divf %98, %99 : vector<1x16xf32>
    %101 = vector.broadcast %100 : vector<1x16xf32> to vector<32x16xf32>
    %102 = arith.subf %96, %101 : vector<32x16xf32>
    %103 = arith.mulf %102, %102 : vector<32x16xf32>
    %cst_55 = arith.constant dense<0.000000e+00> : vector<16xf32>
    %104 = vector.multi_reduction <add>, %103, %cst_55 [0] : vector<32x16xf32> to vector<16xf32>
    %105 = vector.shape_cast %104 : vector<16xf32> to vector<1x16xf32>
    %cst_56 = arith.constant 3.200000e+01 : f32
    %106 = vector.broadcast %cst_56 : f32 to vector<1x16xf32>
    %107 = arith.divf %105, %106 : vector<1x16xf32>
    %108 = vector.broadcast %100 : vector<1x16xf32> to vector<32x16xf32>
    %109 = arith.subf %96, %108 : vector<32x16xf32>
    %cst_57 = arith.constant 9.99999974E-6 : f32
    %110 = vector.broadcast %cst_57 : f32 to vector<1x16xf32>
    %111 = arith.addf %107, %110 : vector<1x16xf32>
    %112 = math.rsqrt %111 : vector<1x16xf32>
    %113 = vector.broadcast %112 : vector<1x16xf32> to vector<32x16xf32>
    %114 = arith.mulf %109, %113 : vector<32x16xf32>
    %115 = vector.extract_strided_slice %93 {offsets = [1, 0], sizes = [1, 16], strides = [1, 1]} : vector<3x16xf32> to vector<1x16xf32>
    %116 = vector.broadcast %115 : vector<1x16xf32> to vector<32x16xf32>
    %117 = arith.mulf %116, %114 : vector<32x16xf32>
    %118 = vector.extract_strided_slice %93 {offsets = [2, 0], sizes = [1, 16], strides = [1, 1]} : vector<3x16xf32> to vector<1x16xf32>
    %119 = vector.broadcast %118 : vector<1x16xf32> to vector<32x16xf32>
    %120 = arith.addf %117, %119 : vector<32x16xf32>
    %cst_58 = arith.constant 0.000000e+00 : f32
    %121 = vector.broadcast %cst_58 : f32 to vector<32x16xf32>
    %122 = arith.maximumf %120, %121 : vector<32x16xf32>
    %c0_59 = arith.constant 0 : index
    %c0_60 = arith.constant 0 : index
    %123 = vector.load %arg19[%c0_59, %c0_60] : memref<32x16xf32, #tpu.memory_space<vmem>>, vector<32x16xf32>
    tpu.vector_store %arg19[%c0_59, %c0_60], %122 {strides = array<i32>} : memref<32x16xf32, #tpu.memory_space<vmem>>, vector<32x16xf32>,
    %c0_61 = arith.constant 0 : index
    %c0_62 = arith.constant 0 : index
    %124 = tpu.strided_load %arg19[%c0_61, %c0_62] {strides = array<i32: 2, 1>} : memref<32x16xf32, #tpu.memory_space<vmem>>, vector<16x16xf32>
    %c0_63 = arith.constant 0 : index
    %c0_64 = arith.constant 0 : index
    %c0_65 = arith.constant 0 : index
    %125 = vector.load %arg5[%c0_63, %c0_64, %c0_65] : memref<2x16x32xf32, #tpu.memory_space<vmem>>, vector<1x16x32xf32>
    %126 = vector.shape_cast %125 : vector<1x16x32xf32> to vector<16x32xf32>
    %cst_66 = arith.constant dense<0.000000e+00> : vector<16x32xf32>
    %127 = tpu.matmul %124, %126, %cst_66 {dimension_numbers = #tpu.dot_dimension_numbers<[1], [0], [0], [1], [0, 0, 1, 1], [], []>} : vector<16x16xf32>, vector<16x32xf32>, vector<16x32xf32> -> vector<16x32xf32>
    %c1_67 = arith.constant 1 : index
    %c0_68 = arith.constant 0 : index
    %128 = tpu.strided_load %arg19[%c1_67, %c0_68] {strides = array<i32: 2, 1>} : memref<32x16xf32, #tpu.memory_space<vmem>>, vector<16x16xf32>
    %c1_69 = arith.constant 1 : index
    %c0_70 = arith.constant 0 : index
    %c0_71 = arith.constant 0 : index
    %129 = vector.load %arg5[%c1_69, %c0_70, %c0_71] : memref<2x16x32xf32, #tpu.memory_space<vmem>>, vector<1x16x32xf32>
    %130 = vector.shape_cast %129 : vector<1x16x32xf32> to vector<16x32xf32>
    %cst_72 = arith.constant dense<0.000000e+00> : vector<16x32xf32>
    %131 = tpu.matmul %128, %130, %cst_72 {dimension_numbers = #tpu.dot_dimension_numbers<[1], [0], [0], [1], [0, 0, 1, 1], [], []>} : vector<16x16xf32>, vector<16x32xf32>, vector<16x32xf32> -> vector<16x32xf32>
    %132 = arith.addf %127, %131 : vector<16x32xf32>
    %c0_73 = arith.constant 0 : index
    %c0_74 = arith.constant 0 : index
    %133 = vector.load %arg10[%c0_73, %c0_74] : memref<3x32xf32, #tpu.memory_space<vmem>>, vector<3x32xf32>
    %134 = vector.extract_strided_slice %133 {offsets = [0, 0], sizes = [1, 32], strides = [1, 1]} : vector<3x32xf32> to vector<1x32xf32>
    %135 = vector.broadcast %134 : vector<1x32xf32> to vector<16x32xf32>
    %136 = arith.addf %132, %135 : vector<16x32xf32>
    %cst_75 = arith.constant dense<0.000000e+00> : vector<32xf32>
    %137 = vector.multi_reduction <add>, %136, %cst_75 [0] : vector<16x32xf32> to vector<32xf32>
    %138 = vector.shape_cast %137 : vector<32xf32> to vector<1x32xf32>
    %cst_76 = arith.constant 1.600000e+01 : f32
    %139 = vector.broadcast %cst_76 : f32 to vector<1x32xf32>
    %140 = arith.divf %138, %139 : vector<1x32xf32>
    %141 = vector.broadcast %140 : vector<1x32xf32> to vector<16x32xf32>
    %142 = arith.subf %136, %141 : vector<16x32xf32>
    %143 = arith.mulf %142, %142 : vector<16x32xf32>
    %cst_77 = arith.constant dense<0.000000e+00> : vector<32xf32>
    %144 = vector.multi_reduction <add>, %143, %cst_77 [0] : vector<16x32xf32> to vector<32xf32>
    %145 = vector.shape_cast %144 : vector<32xf32> to vector<1x32xf32>
    %cst_78 = arith.constant 1.600000e+01 : f32
    %146 = vector.broadcast %cst_78 : f32 to vector<1x32xf32>
    %147 = arith.divf %145, %146 : vector<1x32xf32>
    %148 = vector.broadcast %140 : vector<1x32xf32> to vector<16x32xf32>
    %149 = arith.subf %136, %148 : vector<16x32xf32>
    %cst_79 = arith.constant 9.99999974E-6 : f32
    %150 = vector.broadcast %cst_79 : f32 to vector<1x32xf32>
    %151 = arith.addf %147, %150 : vector<1x32xf32>
    %152 = math.rsqrt %151 : vector<1x32xf32>
    %153 = vector.broadcast %152 : vector<1x32xf32> to vector<16x32xf32>
    %154 = arith.mulf %149, %153 : vector<16x32xf32>
    %155 = vector.extract_strided_slice %133 {offsets = [1, 0], sizes = [1, 32], strides = [1, 1]} : vector<3x32xf32> to vector<1x32xf32>
    %156 = vector.broadcast %155 : vector<1x32xf32> to vector<16x32xf32>
    %157 = arith.mulf %156, %154 : vector<16x32xf32>
    %158 = vector.extract_strided_slice %133 {offsets = [2, 0], sizes = [1, 32], strides = [1, 1]} : vector<3x32xf32> to vector<1x32xf32>
    %159 = vector.broadcast %158 : vector<1x32xf32> to vector<16x32xf32>
    %160 = arith.addf %157, %159 : vector<16x32xf32>
    %cst_80 = arith.constant 0.000000e+00 : f32
    %161 = vector.broadcast %cst_80 : f32 to vector<16x32xf32>
    %162 = arith.maximumf %160, %161 : vector<16x32xf32>
    %c0_81 = arith.constant 0 : index
    %c0_82 = arith.constant 0 : index
    %163 = vector.load %arg20[%c0_81, %c0_82] : memref<16x32xf32, #tpu.memory_space<vmem>>, vector<16x32xf32>
    tpu.vector_store %arg20[%c0_81, %c0_82], %162 {strides = array<i32>} : memref<16x32xf32, #tpu.memory_space<vmem>>, vector<16x32xf32>,
    %c0_83 = arith.constant 0 : index
    %c0_84 = arith.constant 0 : index
    %164 = tpu.strided_load %arg20[%c0_83, %c0_84] {strides = array<i32: 2, 1>} : memref<16x32xf32, #tpu.memory_space<vmem>>, vector<8x32xf32>
    %c0_85 = arith.constant 0 : index
    %c0_86 = arith.constant 0 : index
    %c0_87 = arith.constant 0 : index
    %165 = vector.load %arg6[%c0_85, %c0_86, %c0_87] : memref<2x32x64xf32, #tpu.memory_space<vmem>>, vector<1x32x64xf32>
    %166 = vector.shape_cast %165 : vector<1x32x64xf32> to vector<32x64xf32>
    %cst_88 = arith.constant dense<0.000000e+00> : vector<8x64xf32>
    %167 = tpu.matmul %164, %166, %cst_88 {dimension_numbers = #tpu.dot_dimension_numbers<[1], [0], [0], [1], [0, 0, 1, 1], [], []>} : vector<8x32xf32>, vector<32x64xf32>, vector<8x64xf32> -> vector<8x64xf32>
    %c1_89 = arith.constant 1 : index
    %c0_90 = arith.constant 0 : index
    %168 = tpu.strided_load %arg20[%c1_89, %c0_90] {strides = array<i32: 2, 1>} : memref<16x32xf32, #tpu.memory_space<vmem>>, vector<8x32xf32>
    %c1_91 = arith.constant 1 : index
    %c0_92 = arith.constant 0 : index
    %c0_93 = arith.constant 0 : index
    %169 = vector.load %arg6[%c1_91, %c0_92, %c0_93] : memref<2x32x64xf32, #tpu.memory_space<vmem>>, vector<1x32x64xf32>
    %170 = vector.shape_cast %169 : vector<1x32x64xf32> to vector<32x64xf32>
    %cst_94 = arith.constant dense<0.000000e+00> : vector<8x64xf32>
    %171 = tpu.matmul %168, %170, %cst_94 {dimension_numbers = #tpu.dot_dimension_numbers<[1], [0], [0], [1], [0, 0, 1, 1], [], []>} : vector<8x32xf32>, vector<32x64xf32>, vector<8x64xf32> -> vector<8x64xf32>
    %172 = arith.addf %167, %171 : vector<8x64xf32>
    %c0_95 = arith.constant 0 : index
    %c0_96 = arith.constant 0 : index
    %173 = vector.load %arg11[%c0_95, %c0_96] : memref<3x64xf32, #tpu.memory_space<vmem>>, vector<3x64xf32>
    %174 = vector.extract_strided_slice %173 {offsets = [0, 0], sizes = [1, 64], strides = [1, 1]} : vector<3x64xf32> to vector<1x64xf32>
    %175 = vector.broadcast %174 : vector<1x64xf32> to vector<8x64xf32>
    %176 = arith.addf %172, %175 : vector<8x64xf32>
    %cst_97 = arith.constant dense<0.000000e+00> : vector<64xf32>
    %177 = vector.multi_reduction <add>, %176, %cst_97 [0] : vector<8x64xf32> to vector<64xf32>
    %178 = vector.shape_cast %177 : vector<64xf32> to vector<1x64xf32>
    %cst_98 = arith.constant 8.000000e+00 : f32
    %179 = vector.broadcast %cst_98 : f32 to vector<1x64xf32>
    %180 = arith.divf %178, %179 : vector<1x64xf32>
    %181 = vector.broadcast %180 : vector<1x64xf32> to vector<8x64xf32>
    %182 = arith.subf %176, %181 : vector<8x64xf32>
    %183 = arith.mulf %182, %182 : vector<8x64xf32>
    %cst_99 = arith.constant dense<0.000000e+00> : vector<64xf32>
    %184 = vector.multi_reduction <add>, %183, %cst_99 [0] : vector<8x64xf32> to vector<64xf32>
    %185 = vector.shape_cast %184 : vector<64xf32> to vector<1x64xf32>
    %cst_100 = arith.constant 8.000000e+00 : f32
    %186 = vector.broadcast %cst_100 : f32 to vector<1x64xf32>
    %187 = arith.divf %185, %186 : vector<1x64xf32>
    %188 = vector.broadcast %180 : vector<1x64xf32> to vector<8x64xf32>
    %189 = arith.subf %176, %188 : vector<8x64xf32>
    %cst_101 = arith.constant 9.99999974E-6 : f32
    %190 = vector.broadcast %cst_101 : f32 to vector<1x64xf32>
    %191 = arith.addf %187, %190 : vector<1x64xf32>
    %192 = math.rsqrt %191 : vector<1x64xf32>
    %193 = vector.broadcast %192 : vector<1x64xf32> to vector<8x64xf32>
    %194 = arith.mulf %189, %193 : vector<8x64xf32>
    %195 = vector.extract_strided_slice %173 {offsets = [1, 0], sizes = [1, 64], strides = [1, 1]} : vector<3x64xf32> to vector<1x64xf32>
    %196 = vector.broadcast %195 : vector<1x64xf32> to vector<8x64xf32>
    %197 = arith.mulf %196, %194 : vector<8x64xf32>
    %198 = vector.extract_strided_slice %173 {offsets = [2, 0], sizes = [1, 64], strides = [1, 1]} : vector<3x64xf32> to vector<1x64xf32>
    %199 = vector.broadcast %198 : vector<1x64xf32> to vector<8x64xf32>
    %200 = arith.addf %197, %199 : vector<8x64xf32>
    %cst_102 = arith.constant 0.000000e+00 : f32
    %201 = vector.broadcast %cst_102 : f32 to vector<8x64xf32>
    %202 = arith.maximumf %200, %201 : vector<8x64xf32>
    %c0_103 = arith.constant 0 : index
    %c0_104 = arith.constant 0 : index
    %203 = vector.load %arg21[%c0_103, %c0_104] : memref<8x64xf32, #tpu.memory_space<vmem>>, vector<8x64xf32>
    tpu.vector_store %arg21[%c0_103, %c0_104], %202 {strides = array<i32>} : memref<8x64xf32, #tpu.memory_space<vmem>>, vector<8x64xf32>,
    %c0_105 = arith.constant 0 : index
    %c0_106 = arith.constant 0 : index
    %204 = vector.load %arg15[%c0_105, %c0_106] : memref<3x32xf32, #tpu.memory_space<vmem>>, vector<3x32xf32>
    %c0_107 = arith.constant 0 : index
    %c0_108 = arith.constant 0 : index
    %205 = tpu.strided_load %arg21[%c0_107, %c0_108] {strides = array<i32: 4, 1>} : memref<8x64xf32, #tpu.memory_space<vmem>>, vector<2x64xf32>
    %c0_109 = arith.constant 0 : index
    %c0_110 = arith.constant 0 : index
    %c0_111 = arith.constant 0 : index
    %206 = vector.load %arg12[%c0_109, %c0_110, %c0_111] : memref<4x64x32xf32, #tpu.memory_space<vmem>>, vector<1x64x32xf32>
    %207 = vector.shape_cast %206 : vector<1x64x32xf32> to vector<64x32xf32>
    %cst_112 = arith.constant dense<0.000000e+00> : vector<2x32xf32>
    %208 = tpu.matmul %205, %207, %cst_112 {dimension_numbers = #tpu.dot_dimension_numbers<[1], [0], [0], [1], [0, 0, 1, 1], [], []>} : vector<2x64xf32>, vector<64x32xf32>, vector<2x32xf32> -> vector<2x32xf32>
    %c1_113 = arith.constant 1 : index
    %c0_114 = arith.constant 0 : index
    %209 = tpu.strided_load %arg21[%c1_113, %c0_114] {strides = array<i32: 4, 1>} : memref<8x64xf32, #tpu.memory_space<vmem>>, vector<2x64xf32>
    %c1_115 = arith.constant 1 : index
    %c0_116 = arith.constant 0 : index
    %c0_117 = arith.constant 0 : index
    %210 = vector.load %arg12[%c1_115, %c0_116, %c0_117] : memref<4x64x32xf32, #tpu.memory_space<vmem>>, vector<1x64x32xf32>
    %211 = vector.shape_cast %210 : vector<1x64x32xf32> to vector<64x32xf32>
    %cst_118 = arith.constant dense<0.000000e+00> : vector<2x32xf32>
    %212 = tpu.matmul %209, %211, %cst_118 {dimension_numbers = #tpu.dot_dimension_numbers<[1], [0], [0], [1], [0, 0, 1, 1], [], []>} : vector<2x64xf32>, vector<64x32xf32>, vector<2x32xf32> -> vector<2x32xf32>
    %213 = arith.addf %208, %212 : vector<2x32xf32>
    %c2 = arith.constant 2 : index
    %c0_119 = arith.constant 0 : index
    %214 = tpu.strided_load %arg21[%c2, %c0_119] {strides = array<i32: 4, 1>} : memref<8x64xf32, #tpu.memory_space<vmem>>, vector<2x64xf32>
    %c2_120 = arith.constant 2 : index
    %c0_121 = arith.constant 0 : index
    %c0_122 = arith.constant 0 : index
    %215 = vector.load %arg12[%c2_120, %c0_121, %c0_122] : memref<4x64x32xf32, #tpu.memory_space<vmem>>, vector<1x64x32xf32>
    %216 = vector.shape_cast %215 : vector<1x64x32xf32> to vector<64x32xf32>
    %cst_123 = arith.constant dense<0.000000e+00> : vector<2x32xf32>
    %217 = tpu.matmul %214, %216, %cst_123 {dimension_numbers = #tpu.dot_dimension_numbers<[1], [0], [0], [1], [0, 0, 1, 1], [], []>} : vector<2x64xf32>, vector<64x32xf32>, vector<2x32xf32> -> vector<2x32xf32>
    %218 = arith.addf %213, %217 : vector<2x32xf32>
    %c3 = arith.constant 3 : index
    %c0_124 = arith.constant 0 : index
    %219 = tpu.strided_load %arg21[%c3, %c0_124] {strides = array<i32: 4, 1>} : memref<8x64xf32, #tpu.memory_space<vmem>>, vector<2x64xf32>
    %c3_125 = arith.constant 3 : index
    %c0_126 = arith.constant 0 : index
    %c0_127 = arith.constant 0 : index
    %220 = vector.load %arg12[%c3_125, %c0_126, %c0_127] : memref<4x64x32xf32, #tpu.memory_space<vmem>>, vector<1x64x32xf32>
    %221 = vector.shape_cast %220 : vector<1x64x32xf32> to vector<64x32xf32>
    %cst_128 = arith.constant dense<0.000000e+00> : vector<2x32xf32>
    %222 = tpu.matmul %219, %221, %cst_128 {dimension_numbers = #tpu.dot_dimension_numbers<[1], [0], [0], [1], [0, 0, 1, 1], [], []>} : vector<2x64xf32>, vector<64x32xf32>, vector<2x32xf32> -> vector<2x32xf32>
    %223 = arith.addf %218, %222 : vector<2x32xf32>
    %224 = vector.extract_strided_slice %204 {offsets = [0, 0], sizes = [1, 32], strides = [1, 1]} : vector<3x32xf32> to vector<1x32xf32>
    %225 = vector.broadcast %224 : vector<1x32xf32> to vector<2x32xf32>
    %226 = arith.addf %223, %225 : vector<2x32xf32>
    %cst_129 = arith.constant 0.000000e+00 : f32
    %227 = vector.broadcast %cst_129 : f32 to vector<2x32xf32>
    %228 = arith.maximumf %226, %227 : vector<2x32xf32>
    %c0_130 = arith.constant 0 : index
    %c0_131 = arith.constant 0 : index
    %229 = vector.load %arg13[%c0_130, %c0_131] : memref<32x16xf32, #tpu.memory_space<vmem>>, vector<32x16xf32>
    %cst_132 = arith.constant dense<0.000000e+00> : vector<2x16xf32>
    %230 = tpu.matmul %228, %229, %cst_132 {dimension_numbers = #tpu.dot_dimension_numbers<[1], [0], [0], [1], [0, 0, 1, 1], [], []>} : vector<2x32xf32>, vector<32x16xf32>, vector<2x16xf32> -> vector<2x16xf32>
    %231 = vector.extract_strided_slice %204 {offsets = [1, 0], sizes = [1, 16], strides = [1, 1]} : vector<3x32xf32> to vector<1x16xf32>
    %232 = vector.broadcast %231 : vector<1x16xf32> to vector<2x16xf32>
    %233 = arith.addf %230, %232 : vector<2x16xf32>
    %cst_133 = arith.constant 0.000000e+00 : f32
    %234 = vector.broadcast %cst_133 : f32 to vector<2x16xf32>
    %235 = arith.maximumf %233, %234 : vector<2x16xf32>
    %c0_134 = arith.constant 0 : index
    %c0_135 = arith.constant 0 : index
    %236 = vector.load %arg14[%c0_134, %c0_135] : memref<16x2xf32, #tpu.memory_space<vmem>>, vector<16x2xf32>
    %cst_136 = arith.constant dense<0.000000e+00> : vector<2x2xf32>
    %237 = tpu.matmul %235, %236, %cst_136 {dimension_numbers = #tpu.dot_dimension_numbers<[1], [0], [0], [1], [0, 0, 1, 1], [], []>} : vector<2x16xf32>, vector<16x2xf32>, vector<2x2xf32> -> vector<2x2xf32>
    %238 = vector.extract_strided_slice %204 {offsets = [2, 0], sizes = [1, 2], strides = [1, 1]} : vector<3x32xf32> to vector<1x2xf32>
    %239 = vector.broadcast %238 : vector<1x2xf32> to vector<2x2xf32>
    %240 = arith.addf %237, %239 : vector<2x2xf32>
    %c0_137 = arith.constant 0 : index
    %c0_138 = arith.constant 0 : index
    %241 = vector.load %arg16[%c0_137, %c0_138] : memref<2x2xf32, #tpu.memory_space<vmem>>, vector<2x2xf32>
    tpu.vector_store %arg16[%c0_137, %c0_138], %240 {strides = array<i32>} : memref<2x2xf32, #tpu.memory_space<vmem>>, vector<2x2xf32>,
    return
  }
  func.func @transform_0(%arg0: i32) -> (i32, i32) {
    %c0_i32 = arith.constant 0 : i32
    %c0_i32_0 = arith.constant 0 : i32
    %c0_i32_1 = arith.constant 0 : i32
    return %c0_i32, %c0_i32_0 : i32, i32
  }
  func.func @transform_1(%arg0: i32) -> (i32, i32, i32) {
    %c0_i32 = arith.constant 0 : i32
    %c0_i32_0 = arith.constant 0 : i32
    %c0_i32_1 = arith.constant 0 : i32
    %c0_i32_2 = arith.constant 0 : i32
    return %c0_i32, %c0_i32_0, %c0_i32_1 : i32, i32, i32
  }
  func.func @transform_2(%arg0: i32) -> (i32, i32, i32) {
    %c0_i32 = arith.constant 0 : i32
    %c0_i32_0 = arith.constant 0 : i32
    %c0_i32_1 = arith.constant 0 : i32
    %c0_i32_2 = arith.constant 0 : i32
    return %c0_i32, %c0_i32_0, %c0_i32_1 : i32, i32, i32
  }
  func.func @transform_3(%arg0: i32) -> (i32, i32, i32) {
    %c0_i32 = arith.constant 0 : i32
    %c0_i32_0 = arith.constant 0 : i32
    %c0_i32_1 = arith.constant 0 : i32
    %c0_i32_2 = arith.constant 0 : i32
    return %c0_i32, %c0_i32_0, %c0_i32_1 : i32, i32, i32
  }
  func.func @transform_4(%arg0: i32) -> (i32, i32, i32) {
    %c0_i32 = arith.constant 0 : i32
    %c0_i32_0 = arith.constant 0 : i32
    %c0_i32_1 = arith.constant 0 : i32
    %c0_i32_2 = arith.constant 0 : i32
    return %c0_i32, %c0_i32_0, %c0_i32_1 : i32, i32, i32
  }
  func.func @transform_5(%arg0: i32) -> (i32, i32, i32) {
    %c0_i32 = arith.constant 0 : i32
    %c0_i32_0 = arith.constant 0 : i32
    %c0_i32_1 = arith.constant 0 : i32
    %c0_i32_2 = arith.constant 0 : i32
    return %c0_i32, %c0_i32_0, %c0_i32_1 : i32, i32, i32
  }
  func.func @transform_6(%arg0: i32) -> (i32, i32) {
    %c0_i32 = arith.constant 0 : i32
    %c0_i32_0 = arith.constant 0 : i32
    %c0_i32_1 = arith.constant 0 : i32
    return %c0_i32, %c0_i32_0 : i32, i32
  }
  func.func @transform_7(%arg0: i32) -> (i32, i32) {
    %c0_i32 = arith.constant 0 : i32
    %c0_i32_0 = arith.constant 0 : i32
    %c0_i32_1 = arith.constant 0 : i32
    return %c0_i32, %c0_i32_0 : i32, i32
  }
  func.func @transform_8(%arg0: i32) -> (i32, i32) {
    %c0_i32 = arith.constant 0 : i32
    %c0_i32_0 = arith.constant 0 : i32
    %c0_i32_1 = arith.constant 0 : i32
    return %c0_i32, %c0_i32_0 : i32, i32
  }
  func.func @transform_9(%arg0: i32) -> (i32, i32) {
    %c0_i32 = arith.constant 0 : i32
    %c0_i32_0 = arith.constant 0 : i32
    %c0_i32_1 = arith.constant 0 : i32
    return %c0_i32, %c0_i32_0 : i32, i32
  }
  func.func @transform_10(%arg0: i32) -> (i32, i32) {
    %c0_i32 = arith.constant 0 : i32
    %c0_i32_0 = arith.constant 0 : i32
    %c0_i32_1 = arith.constant 0 : i32
    return %c0_i32, %c0_i32_0 : i32, i32
  }
  func.func @transform_11(%arg0: i32) -> (i32, i32, i32) {
    %c0_i32 = arith.constant 0 : i32
    %c0_i32_0 = arith.constant 0 : i32
    %c0_i32_1 = arith.constant 0 : i32
    %c0_i32_2 = arith.constant 0 : i32
    return %c0_i32, %c0_i32_0, %c0_i32_1 : i32, i32, i32
  }
  func.func @transform_12(%arg0: i32) -> (i32, i32) {
    %c0_i32 = arith.constant 0 : i32
    %c0_i32_0 = arith.constant 0 : i32
    %c0_i32_1 = arith.constant 0 : i32
    return %c0_i32, %c0_i32_0 : i32, i32
  }
  func.func @transform_13(%arg0: i32) -> (i32, i32) {
    %c0_i32 = arith.constant 0 : i32
    %c0_i32_0 = arith.constant 0 : i32
    %c0_i32_1 = arith.constant 0 : i32
    return %c0_i32, %c0_i32_0 : i32, i32
  }
  func.func @transform_14(%arg0: i32) -> (i32, i32) {
    %c0_i32 = arith.constant 0 : i32
    %c0_i32_0 = arith.constant 0 : i32
    %c0_i32_1 = arith.constant 0 : i32
    return %c0_i32, %c0_i32_0 : i32, i32
  }
  func.func @transform_15(%arg0: i32) -> (i32, i32) {
    %c0_i32 = arith.constant 0 : i32
    %c0_i32_0 = arith.constant 0 : i32
    %c0_i32_1 = arith.constant 0 : i32
    return %c0_i32, %c0_i32_0 : i32, i32
  }
}

</mosaic_0001>

<llo_original>
// kernel: convnet_forward.1
$region0: #{convnet_forward.1}
  #allocation0 [shape = 'u32[]', space=smem, size = 0x4, offset = 0x4, fixed_abs, tag = 'smem constant byte address 0x4 - core index']
  #allocation1 [shape = 'u32[144,128]{1,0:T(1,128)}', space=vmem, size = 0x12000, scoped, tag = 'internal scratch']
  #allocation2 [shape = 'f32[128,4]{1,0:T(8,128)}', space=vmem, size = 0x10000, scoped, tag = 'scratch operand']
  #allocation3 [shape = 'f32[64,8]{1,0:T(8,128)}', space=vmem, size = 0x8000, scoped, tag = 'scratch operand']
  #allocation4 [shape = 'f32[32,16]{1,0:T(8,128)}', space=vmem, size = 0x4000, scoped, tag = 'scratch operand']
  #allocation5 [shape = 'f32[16,32]{1,0:T(8,128)}', space=vmem, size = 0x2000, scoped, tag = 'scratch operand']
  #allocation6 [shape = 'f32[8,64]{1,0:T(8,128)}', space=vmem, size = 0x1000, scoped, tag = 'scratch operand']
  %s0 = inlined_call_operand.vmem [shape: f32[256,1], index: 0, kind: input, shape index: {}]
  %s1 = inlined_call_operand.vmem [shape: f32[2,1,4], index: 1, kind: input, shape index: {}]
  %s2 = inlined_call_operand.vmem [shape: f32[2,4,8], index: 2, kind: input, shape index: {}]
  %s3 = inlined_call_operand.vmem [shape: f32[2,8,16], index: 3, kind: input, shape index: {}]
  %s4 = inlined_call_operand.vmem [shape: f32[2,16,32], index: 4, kind: input, shape index: {}]
  %s5 = inlined_call_operand.vmem [shape: f32[2,32,64], index: 5, kind: input, shape index: {}]
  %s6 = inlined_call_operand.vmem [shape: f32[3,4], index: 6, kind: input, shape index: {}]
  %s7 = inlined_call_operand.vmem [shape: f32[3,8], index: 7, kind: input, shape index: {}]
  %s8 = inlined_call_operand.vmem [shape: f32[3,16], index: 8, kind: input, shape index: {}]
  %s9 = inlined_call_operand.vmem [shape: f32[3,32], index: 9, kind: input, shape index: {}]
  %s10 = inlined_call_operand.vmem [shape: f32[3,64], index: 10, kind: input, shape index: {}]
  %s11 = inlined_call_operand.vmem [shape: f32[4,64,32], index: 11, kind: input, shape index: {}]
  %s12 = inlined_call_operand.vmem [shape: f32[32,16], index: 12, kind: input, shape index: {}]
  %s13 = inlined_call_operand.vmem [shape: f32[16,2], index: 13, kind: input, shape index: {}]
  %s14 = inlined_call_operand.vmem [shape: f32[3,32], index: 14, kind: input, shape index: {}]
  %s15 = inlined_call_operand.hbm [shape: f32[2,2], index: 15, kind: output, shape index: {}]
  %s16 = sld [smem:[#allocation0]]
  $region70: #{convnet_forward.1} parent=0
    _
  %s18 = ssub.s32 1, %s16
  %s19 = scalar_select 0, %s18, %s16
  $region1: #{convnet_forward.1} parent=0
    #allocation7 [shape = 'u8[1024]{0}', space=vmem, size = 0x400, scoped, tag = 'output window, operand 0, single buffered']
    #allocation8 [shape = 's32[1]{0}', space=sflag, size = 0x4, scoped, tag = 'scoped memory for convnet_forward.1']
    %20 = vsyncpa [#allocation8], 0
    // Predicated region
    $region2: #{convnet_forward.1} parent=1 // pred_check
      _
    $region3: #{convnet_forward.1} parent=1 // pred_check_branch
      %22 = sbr.rel (0) target = $region5
    $region4: #{convnet_forward.1} parent=1 // pred_region
      _
    $region5: #{convnet_forward.1} parent=1 // pred_fallthru
      _
    // Predicated region
    $region6: #{convnet_forward.1} parent=1 // pred_check
      _
    $region7: #{convnet_forward.1} parent=1 // pred_check_branch
      %24 = sbr.rel (0) target = $region9
    $region8: #{convnet_forward.1} parent=1 // pred_region
      _
    $region9: #{convnet_forward.1} parent=1 // pred_fallthru
      _
    // Predicated region
    $region10: #{convnet_forward.1} parent=1 // pred_check
      _
    $region11: #{convnet_forward.1} parent=1 // pred_check_branch
      %26 = sbr.rel (0) target = $region13
    $region12: #{convnet_forward.1} parent=1 // pred_region
      _
    $region13: #{convnet_forward.1} parent=1 // pred_fallthru
      _
    // Predicated region
    $region14: #{convnet_forward.1} parent=1 // pred_check
      _
    $region15: #{convnet_forward.1} parent=1 // pred_check_branch
      %28 = sbr.rel (0) target = $region17
    $region16: #{convnet_forward.1} parent=1 // pred_region
      _
    $region17: #{convnet_forward.1} parent=1 // pred_fallthru
      _
    // Predicated region
    $region18: #{convnet_forward.1} parent=1 // pred_check
      _
    $region19: #{convnet_forward.1} parent=1 // pred_check_branch
      %30 = sbr.rel (0) target = $region21
    $region20: #{convnet_forward.1} parent=1 // pred_region
      _
    $region21: #{convnet_forward.1} parent=1 // pred_fallthru
      _
    // Predicated region
    $region22: #{convnet_forward.1} parent=1 // pred_check
      _
    $region23: #{convnet_forward.1} parent=1 // pred_check_branch
      %32 = sbr.rel (0) target = $region25
    $region24: #{convnet_forward.1} parent=1 // pred_region
      _
    $region25: #{convnet_forward.1} parent=1 // pred_fallthru
      _
    // Predicated region
    $region26: #{convnet_forward.1} parent=1 // pred_check
      _
    $region27: #{convnet_forward.1} parent=1 // pred_check_branch
      %34 = sbr.rel (0) target = $region29
    $region28: #{convnet_forward.1} parent=1 // pred_region
      _
    $region29: #{convnet_forward.1} parent=1 // pred_fallthru
      _
    // Predicated region
    $region30: #{convnet_forward.1} parent=1 // pred_check
      _
    $region31: #{convnet_forward.1} parent=1 // pred_check_branch
      %36 = sbr.rel (0) target = $region33
    $region32: #{convnet_forward.1} parent=1 // pred_region
      _
    $region33: #{convnet_forward.1} parent=1 // pred_fallthru
      _
    // Predicated region
    $region34: #{convnet_forward.1} parent=1 // pred_check
      _
    $region35: #{convnet_forward.1} parent=1 // pred_check_branch
      %38 = sbr.rel (0) target = $region37
    $region36: #{convnet_forward.1} parent=1 // pred_region
      _
    $region37: #{convnet_forward.1} parent=1 // pred_fallthru
      _
    // Predicated region
    $region38: #{convnet_forward.1} parent=1 // pred_check
      _
    $region39: #{convnet_forward.1} parent=1 // pred_check_branch
      %40 = sbr.rel (0) target = $region41
    $region40: #{convnet_forward.1} parent=1 // pred_region
      _
    $region41: #{convnet_forward.1} parent=1 // pred_fallthru
      _
    // Predicated region
    $region42: #{convnet_forward.1} parent=1 // pred_check
      _
    $region43: #{convnet_forward.1} parent=1 // pred_check_branch
      %42 = sbr.rel (0) target = $region45
    $region44: #{convnet_forward.1} parent=1 // pred_region
      _
    $region45: #{convnet_forward.1} parent=1 // pred_fallthru
      _
    // Predicated region
    $region46: #{convnet_forward.1} parent=1 // pred_check
      _
    $region47: #{convnet_forward.1} parent=1 // pred_check_branch
      %44 = sbr.rel (0) target = $region49
    $region48: #{convnet_forward.1} parent=1 // pred_region
      _
    $region49: #{convnet_forward.1} parent=1 // pred_fallthru
      _
    // Predicated region
    $region50: #{convnet_forward.1} parent=1 // pred_check
      _
    $region51: #{convnet_forward.1} parent=1 // pred_check_branch
      %46 = sbr.rel (0) target = $region53
    $region52: #{convnet_forward.1} parent=1 // pred_region
      _
    $region53: #{convnet_forward.1} parent=1 // pred_fallthru
      _
    // Predicated region
    $region54: #{convnet_forward.1} parent=1 // pred_check
      _
    $region55: #{convnet_forward.1} parent=1 // pred_check_branch
      %48 = sbr.rel (0) target = $region57
    $region56: #{convnet_forward.1} parent=1 // pred_region
      _
    $region57: #{convnet_forward.1} parent=1 // pred_fallthru
      _
    // Predicated region
    $region58: #{convnet_forward.1} parent=1 // pred_check
      _
    $region59: #{convnet_forward.1} parent=1 // pred_check_branch
      %50 = sbr.rel (0) target = $region61
    $region60: #{convnet_forward.1} parent=1 // pred_region
      _
    $region61: #{convnet_forward.1} parent=1 // pred_fallthru
      _
    %v51 = vld [vmem:[%s0] ss:$2 sm:$0xff]
    %s52 = scalar_lea.vmem %s0, 16
    %v53 = vld [vmem:[%s52] ss:$2 sm:$0xff]
    %s54 = scalar_lea.vmem %s0, 32
    %v55 = vld [vmem:[%s54] ss:$2 sm:$0xff]
    %s56 = scalar_lea.vmem %s0, 48
    %v57 = vld [vmem:[%s56] ss:$2 sm:$0xff]
    %s58 = scalar_lea.vmem %s0, 64
    %v59 = vld [vmem:[%s58] ss:$2 sm:$0xff]
    %s60 = scalar_lea.vmem %s0, 80
    %v61 = vld [vmem:[%s60] ss:$2 sm:$0xff]
    %s62 = scalar_lea.vmem %s0, 96
    %v63 = vld [vmem:[%s62] ss:$2 sm:$0xff]
    %s64 = scalar_lea.vmem %s0, 112
    %v65 = vld [vmem:[%s64] ss:$2 sm:$0xff]
    %s66 = scalar_lea.vmem %s0, 128
    %v67 = vld [vmem:[%s66] ss:$2 sm:$0xff]
    %s68 = scalar_lea.vmem %s0, 144
    %v69 = vld [vmem:[%s68] ss:$2 sm:$0xff]
    %s70 = scalar_lea.vmem %s0, 160
    %v71 = vld [vmem:[%s70] ss:$2 sm:$0xff]
    %s72 = scalar_lea.vmem %s0, 176
    %v73 = vld [vmem:[%s72] ss:$2 sm:$0xff]
    %s74 = scalar_lea.vmem %s0, 192
    %v75 = vld [vmem:[%s74] ss:$2 sm:$0xff]
    %s76 = scalar_lea.vmem %s0, 208
    %v77 = vld [vmem:[%s76] ss:$2 sm:$0xff]
    %s78 = scalar_lea.vmem %s0, 224
    %v79 = vld [vmem:[%s78] ss:$2 sm:$0xff]
    %s80 = scalar_lea.vmem %s0, 240
    %v81 = vld [vmem:[%s80] ss:$2 sm:$0xff]
    %v82 = vld [vmem:[%s1] sm:$0x1]
    %84 = vset.pattern.permute.xlu0 0
    %85 = vperm.xlu0 %84, %v51
    %v86 = vpop.permute.xlu0 %85
    %89 = vset.pattern.permute.xlu0 0
    %90 = vperm.xlu0 %89, %v53
    %v91 = vpop.permute.xlu0 %90
    %94 = vset.pattern.permute.xlu0 0
    %95 = vperm.xlu0 %94, %v55
    %v96 = vpop.permute.xlu0 %95
    %99 = vset.pattern.permute.xlu0 0
    %100 = vperm.xlu0 %99, %v57
    %v101 = vpop.permute.xlu0 %100
    %104 = vset.pattern.permute.xlu0 0
    %105 = vperm.xlu0 %104, %v59
    %v106 = vpop.permute.xlu0 %105
    %109 = vset.pattern.permute.xlu0 0
    %110 = vperm.xlu0 %109, %v61
    %v111 = vpop.permute.xlu0 %110
    %114 = vset.pattern.permute.xlu0 0
    %115 = vperm.xlu0 %114, %v63
    %v116 = vpop.permute.xlu0 %115
    %119 = vset.pattern.permute.xlu0 0
    %120 = vperm.xlu0 %119, %v65
    %v121 = vpop.permute.xlu0 %120
    %124 = vset.pattern.permute.xlu0 0
    %125 = vperm.xlu0 %124, %v67
    %v126 = vpop.permute.xlu0 %125
    %129 = vset.pattern.permute.xlu0 0
    %130 = vperm.xlu0 %129, %v69
    %v131 = vpop.permute.xlu0 %130
    %134 = vset.pattern.permute.xlu0 0
    %135 = vperm.xlu0 %134, %v71
    %v136 = vpop.permute.xlu0 %135
    %139 = vset.pattern.permute.xlu0 0
    %140 = vperm.xlu0 %139, %v73
    %v141 = vpop.permute.xlu0 %140
    %144 = vset.pattern.permute.xlu0 0
    %145 = vperm.xlu0 %144, %v75
    %v146 = vpop.permute.xlu0 %145
    %149 = vset.pattern.permute.xlu0 0
    %150 = vperm.xlu0 %149, %v77
    %v151 = vpop.permute.xlu0 %150
    %154 = vset.pattern.permute.xlu0 0
    %155 = vperm.xlu0 %154, %v79
    %v156 = vpop.permute.xlu0 %155
    %159 = vset.pattern.permute.xlu0 0
    %160 = vperm.xlu0 %159, %v81
    %v161 = vpop.permute.xlu0 %160
    %v164 = vlaneseq
    %v165 = vshrl.u32 %v164, 7
    %v166 = vsub.s32 0, %v165
    %v167 = vrot.slane %v82, %v166
    %v169 = vmul.f32 %v86, %v167
    %v170 = vmul.f32 %v91, %v167
    %v171 = vmul.f32 %v96, %v167
    %v172 = vmul.f32 %v101, %v167
    %v173 = vmul.f32 %v106, %v167
    %v174 = vmul.f32 %v111, %v167
    %v175 = vmul.f32 %v116, %v167
    %v176 = vmul.f32 %v121, %v167
    %v177 = vmul.f32 %v126, %v167
    %v178 = vmul.f32 %v131, %v167
    %v179 = vmul.f32 %v136, %v167
    %v180 = vmul.f32 %v141, %v167
    %v181 = vmul.f32 %v146, %v167
    %v182 = vmul.f32 %v151, %v167
    %v183 = vmul.f32 %v156, %v167
    %v184 = vmul.f32 %v161, %v167
    %s185 = scalar_lea.vmem %s0, 1
    %v186 = vld [vmem:[%s185] ss:$2 sm:$0xff]
    %s187 = scalar_lea.vmem %s0, 17
    %v188 = vld [vmem:[%s187] ss:$2 sm:$0xff]
    %s189 = scalar_lea.vmem %s0, 33
    %v190 = vld [vmem:[%s189] ss:$2 sm:$0xff]
    %s191 = scalar_lea.vmem %s0, 49
    %v192 = vld [vmem:[%s191] ss:$2 sm:$0xff]
    %s193 = scalar_lea.vmem %s0, 65
    %v194 = vld [vmem:[%s193] ss:$2 sm:$0xff]
    %s195 = scalar_lea.vmem %s0, 81
    %v196 = vld [vmem:[%s195] ss:$2 sm:$0xff]
    %s197 = scalar_lea.vmem %s0, 97
    %v198 = vld [vmem:[%s197] ss:$2 sm:$0xff]
    %s199 = scalar_lea.vmem %s0, 113
    %v200 = vld [vmem:[%s199] ss:$2 sm:$0xff]
    %s201 = scalar_lea.vmem %s0, 129
    %v202 = vld [vmem:[%s201] ss:$2 sm:$0xff]
    %s203 = scalar_lea.vmem %s0, 145
    %v204 = vld [vmem:[%s203] ss:$2 sm:$0xff]
    %s205 = scalar_lea.vmem %s0, 161
    %v206 = vld [vmem:[%s205] ss:$2 sm:$0xff]
    %s207 = scalar_lea.vmem %s0, 177
    %v208 = vld [vmem:[%s207] ss:$2 sm:$0xff]
    %s209 = scalar_lea.vmem %s0, 193
    %v210 = vld [vmem:[%s209] ss:$2 sm:$0xff]
    %s211 = scalar_lea.vmem %s0, 209
    %v212 = vld [vmem:[%s211] ss:$2 sm:$0xff]
    %s213 = scalar_lea.vmem %s0, 225
    %v214 = vld [vmem:[%s213] ss:$2 sm:$0xff]
    %s215 = scalar_lea.vmem %s0, 241
    %v216 = vld [vmem:[%s215] ss:$2 sm:$0xff]
    %s217 = scalar_lea.vmem %s1, 1
    %v218 = vld [vmem:[%s217] sm:$0x1]
    %220 = vset.pattern.permute.xlu0 0
    %221 = vperm.xlu0 %220, %v186
    %v222 = vpop.permute.xlu0 %221
    %225 = vset.pattern.permute.xlu0 0
    %226 = vperm.xlu0 %225, %v188
    %v227 = vpop.permute.xlu0 %226
    %230 = vset.pattern.permute.xlu0 0
    %231 = vperm.xlu0 %230, %v190
    %v232 = vpop.permute.xlu0 %231
    %235 = vset.pattern.permute.xlu0 0
    %236 = vperm.xlu0 %235, %v192
    %v237 = vpop.permute.xlu0 %236
    %240 = vset.pattern.permute.xlu0 0
    %241 = vperm.xlu0 %240, %v194
    %v242 = vpop.permute.xlu0 %241
    %245 = vset.pattern.permute.xlu0 0
    %246 = vperm.xlu0 %245, %v196
    %v247 = vpop.permute.xlu0 %246
    %250 = vset.pattern.permute.xlu0 0
    %251 = vperm.xlu0 %250, %v198
    %v252 = vpop.permute.xlu0 %251
    %255 = vset.pattern.permute.xlu0 0
    %256 = vperm.xlu0 %255, %v200
    %v257 = vpop.permute.xlu0 %256
    %260 = vset.pattern.permute.xlu0 0
    %261 = vperm.xlu0 %260, %v202
    %v262 = vpop.permute.xlu0 %261
    %265 = vset.pattern.permute.xlu0 0
    %266 = vperm.xlu0 %265, %v204
    %v267 = vpop.permute.xlu0 %266
    %270 = vset.pattern.permute.xlu0 0
    %271 = vperm.xlu0 %270, %v206
    %v272 = vpop.permute.xlu0 %271
    %275 = vset.pattern.permute.xlu0 0
    %276 = vperm.xlu0 %275, %v208
    %v277 = vpop.permute.xlu0 %276
    %280 = vset.pattern.permute.xlu0 0
    %281 = vperm.xlu0 %280, %v210
    %v282 = vpop.permute.xlu0 %281
    %285 = vset.pattern.permute.xlu0 0
    %286 = vperm.xlu0 %285, %v212
    %v287 = vpop.permute.xlu0 %286
    %290 = vset.pattern.permute.xlu0 0
    %291 = vperm.xlu0 %290, %v214
    %v292 = vpop.permute.xlu0 %291
    %295 = vset.pattern.permute.xlu0 0
    %296 = vperm.xlu0 %295, %v216
    %v297 = vpop.permute.xlu0 %296
    %v300 = vlaneseq
    %v301 = vshrl.u32 %v300, 7
    %v302 = vsub.s32 0, %v301
    %v303 = vrot.slane %v218, %v302
    %v305 = vmul.f32 %v222, %v303
    %v306 = vmul.f32 %v227, %v303
    %v307 = vmul.f32 %v232, %v303
    %v308 = vmul.f32 %v237, %v303
    %v309 = vmul.f32 %v242, %v303
    %v310 = vmul.f32 %v247, %v303
    %v311 = vmul.f32 %v252, %v303
    %v312 = vmul.f32 %v257, %v303
    %v313 = vmul.f32 %v262, %v303
    %v314 = vmul.f32 %v267, %v303
    %v315 = vmul.f32 %v272, %v303
    %v316 = vmul.f32 %v277, %v303
    %v317 = vmul.f32 %v282, %v303
    %v318 = vmul.f32 %v287, %v303
    %v319 = vmul.f32 %v292, %v303
    %v320 = vmul.f32 %v297, %v303
    %v321 = vadd.f32 %v169, %v305
    %v322 = vadd.f32 %v170, %v306
    %v323 = vadd.f32 %v171, %v307
    %v324 = vadd.f32 %v172, %v308
    %v325 = vadd.f32 %v173, %v309
    %v326 = vadd.f32 %v174, %v310
    %v327 = vadd.f32 %v175, %v311
    %v328 = vadd.f32 %v176, %v312
    %v329 = vadd.f32 %v177, %v313
    %v330 = vadd.f32 %v178, %v314
    %v331 = vadd.f32 %v179, %v315
    %v332 = vadd.f32 %v180, %v316
    %v333 = vadd.f32 %v181, %v317
    %v334 = vadd.f32 %v182, %v318
    %v335 = vadd.f32 %v183, %v319
    %v336 = vadd.f32 %v184, %v320
    %v337 = vld [vmem:[%s6] sm:$0x7]
    %v338 = vlaneseq
    %v339 = vshrl.u32 %v338, 7
    %v340 = vsub.s32 0, %v339
    %v341 = vrot.slane %v337, %v340
    %v342 = vadd.f32 %v321, %v341
    %v343 = vadd.f32 %v322, %v341
    %v344 = vadd.f32 %v323, %v341
    %v345 = vadd.f32 %v324, %v341
    %v346 = vadd.f32 %v325, %v341
    %v347 = vadd.f32 %v326, %v341
    %v348 = vadd.f32 %v327, %v341
    %v349 = vadd.f32 %v328, %v341
    %v350 = vadd.f32 %v329, %v341
    %v351 = vadd.f32 %v330, %v341
    %v352 = vadd.f32 %v331, %v341
    %v353 = vadd.f32 %v332, %v341
    %v354 = vadd.f32 %v333, %v341
    %v355 = vadd.f32 %v334, %v341
    %v356 = vadd.f32 %v335, %v341
    %v357 = vadd.f32 %v336, %v341
    %vm358 = vcmask 31744
    %v359 = vsel %vm358, %v342, 0.0
    %v360 = vsel %vm358, %v343, 0.0
    %v361 = vadd.f32 %v359, %v360
    %v362 = vsel %vm358, %v344, 0.0
    %v363 = vadd.f32 %v361, %v362
    %v364 = vsel %vm358, %v345, 0.0
    %v365 = vadd.f32 %v363, %v364
    %v366 = vsel %vm358, %v346, 0.0
    %v367 = vadd.f32 %v365, %v366
    %v368 = vsel %vm358, %v347, 0.0
    %v369 = vadd.f32 %v367, %v368
    %v370 = vsel %vm358, %v348, 0.0
    %v371 = vadd.f32 %v369, %v370
    %v372 = vsel %vm358, %v349, 0.0
    %v373 = vadd.f32 %v371, %v372
    %v374 = vsel %vm358, %v350, 0.0
    %v375 = vadd.f32 %v373, %v374
    %v376 = vsel %vm358, %v351, 0.0
    %v377 = vadd.f32 %v375, %v376
    %v378 = vsel %vm358, %v352, 0.0
    %v379 = vadd.f32 %v377, %v378
    %v380 = vsel %vm358, %v353, 0.0
    %v381 = vadd.f32 %v379, %v380
    %v382 = vsel %vm358, %v354, 0.0
    %v383 = vadd.f32 %v381, %v382
    %v384 = vsel %vm358, %v355, 0.0
    %v385 = vadd.f32 %v383, %v384
    %v386 = vsel %vm358, %v356, 0.0
    %v387 = vadd.f32 %v385, %v386
    %v388 = vsel %vm358, %v357, 0.0
    %v389 = vadd.f32 %v387, %v388
    %v390 = vrot.slane %v389, 4
    %v391 = vadd.f32 %v389, %v390
    %v392 = vrot.slane %v391, 2
    %v393 = vadd.f32 %v391, %v392
    %v394 = vrot.slane %v393, 1
    %v395 = vadd.f32 %v393, %v394
    %v396 = vrcp.pop 128.0
    %v397 = vmul.f32 %v395, %v396
    %v398 = vsub.f32 %v342, %v397
    %v399 = vsub.f32 %v343, %v397
    %v400 = vsub.f32 %v344, %v397
    %v401 = vsub.f32 %v345, %v397
    %v402 = vsub.f32 %v346, %v397
    %v403 = vsub.f32 %v347, %v397
    %v404 = vsub.f32 %v348, %v397
    %v405 = vsub.f32 %v349, %v397
    %v406 = vsub.f32 %v350, %v397
    %v407 = vsub.f32 %v351, %v397
    %v408 = vsub.f32 %v352, %v397
    %v409 = vsub.f32 %v353, %v397
    %v410 = vsub.f32 %v354, %v397
    %v411 = vsub.f32 %v355, %v397
    %v412 = vsub.f32 %v356, %v397
    %v413 = vsub.f32 %v357, %v397
    %v414 = vmul.f32 %v398, %v398
    %v415 = vmul.f32 %v399, %v399
    %v416 = vmul.f32 %v400, %v400
    %v417 = vmul.f32 %v401, %v401
    %v418 = vmul.f32 %v402, %v402
    %v419 = vmul.f32 %v403, %v403
    %v420 = vmul.f32 %v404, %v404
    %v421 = vmul.f32 %v405, %v405
    %v422 = vmul.f32 %v406, %v406
    %v423 = vmul.f32 %v407, %v407
    %v424 = vmul.f32 %v408, %v408
    %v425 = vmul.f32 %v409, %v409
    %v426 = vmul.f32 %v410, %v410
    %v427 = vmul.f32 %v411, %v411
    %v428 = vmul.f32 %v412, %v412
    %v429 = vmul.f32 %v413, %v413
    %v430 = vsel %vm358, %v414, 0.0
    %v431 = vsel %vm358, %v415, 0.0
    %v432 = vadd.f32 %v430, %v431
    %v433 = vsel %vm358, %v416, 0.0
    %v434 = vadd.f32 %v432, %v433
    %v435 = vsel %vm358, %v417, 0.0
    %v436 = vadd.f32 %v434, %v435
    %v437 = vsel %vm358, %v418, 0.0
    %v438 = vadd.f32 %v436, %v437
    %v439 = vsel %vm358, %v419, 0.0
    %v440 = vadd.f32 %v438, %v439
    %v441 = vsel %vm358, %v420, 0.0
    %v442 = vadd.f32 %v440, %v441
    %v443 = vsel %vm358, %v421, 0.0
    %v444 = vadd.f32 %v442, %v443
    %v445 = vsel %vm358, %v422, 0.0
    %v446 = vadd.f32 %v444, %v445
    %v447 = vsel %vm358, %v423, 0.0
    %v448 = vadd.f32 %v446, %v447
    %v449 = vsel %vm358, %v424, 0.0
    %v450 = vadd.f32 %v448, %v449
    %v451 = vsel %vm358, %v425, 0.0
    %v452 = vadd.f32 %v450, %v451
    %v453 = vsel %vm358, %v426, 0.0
    %v454 = vadd.f32 %v452, %v453
    %v455 = vsel %vm358, %v427, 0.0
    %v456 = vadd.f32 %v454, %v455
    %v457 = vsel %vm358, %v428, 0.0
    %v458 = vadd.f32 %v456, %v457
    %v459 = vsel %vm358, %v429, 0.0
    %v460 = vadd.f32 %v458, %v459
    %v461 = vrot.slane %v460, 4
    %v462 = vadd.f32 %v460, %v461
    %v463 = vrot.slane %v462, 2
    %v464 = vadd.f32 %v462, %v463
    %v465 = vrot.slane %v464, 1
    %v466 = vadd.f32 %v464, %v465
    %v467 = vmul.f32 %v466, %v396
    %v468 = vadd.f32 %v467, 1e-05
    %v469 = vrsqrt.pop %v468
    %v470 = vmul.f32 %v398, %v469
    %v471 = vmul.f32 %v399, %v469
    %v472 = vmul.f32 %v400, %v469
    %v473 = vmul.f32 %v401, %v469
    %v474 = vmul.f32 %v402, %v469
    %v475 = vmul.f32 %v403, %v469
    %v476 = vmul.f32 %v404, %v469
    %v477 = vmul.f32 %v405, %v469
    %v478 = vmul.f32 %v406, %v469
    %v479 = vmul.f32 %v407, %v469
    %v480 = vmul.f32 %v408, %v469
    %v481 = vmul.f32 %v409, %v469
    %v482 = vmul.f32 %v410, %v469
    %v483 = vmul.f32 %v411, %v469
    %v484 = vmul.f32 %v412, %v469
    %v485 = vmul.f32 %v413, %v469
    %v486 = vlaneseq
    %v487 = vshrl.u32 %v486, 7
    %v488 = vsub.s32 1, %v487
    %v489 = vrot.slane %v337, %v488
    %v490 = vmul.f32 %v489, %v470
    %v491 = vmul.f32 %v489, %v471
    %v492 = vmul.f32 %v489, %v472
    %v493 = vmul.f32 %v489, %v473
    %v494 = vmul.f32 %v489, %v474
    %v495 = vmul.f32 %v489, %v475
    %v496 = vmul.f32 %v489, %v476
    %v497 = vmul.f32 %v489, %v477
    %v498 = vmul.f32 %v489, %v478
    %v499 = vmul.f32 %v489, %v479
    %v500 = vmul.f32 %v489, %v480
    %v501 = vmul.f32 %v489, %v481
    %v502 = vmul.f32 %v489, %v482
    %v503 = vmul.f32 %v489, %v483
    %v504 = vmul.f32 %v489, %v484
    %v505 = vmul.f32 %v489, %v485
    %v506 = vlaneseq
    %v507 = vshrl.u32 %v506, 7
    %v508 = vsub.s32 2, %v507
    %v509 = vrot.slane %v337, %v508
    %v510 = vadd.f32 %v490, %v509
    %v511 = vadd.f32 %v491, %v509
    %v512 = vadd.f32 %v492, %v509
    %v513 = vadd.f32 %v493, %v509
    %v514 = vadd.f32 %v494, %v509
    %v515 = vadd.f32 %v495, %v509
    %v516 = vadd.f32 %v496, %v509
    %v517 = vadd.f32 %v497, %v509
    %v518 = vadd.f32 %v498, %v509
    %v519 = vadd.f32 %v499, %v509
    %v520 = vadd.f32 %v500, %v509
    %v521 = vadd.f32 %v501, %v509
    %v522 = vadd.f32 %v502, %v509
    %v523 = vadd.f32 %v503, %v509
    %v524 = vadd.f32 %v504, %v509
    %v525 = vadd.f32 %v505, %v509
    %v526 = vmax.f32 %v510, 0.0
    %v527 = vmax.f32 %v511, 0.0
    %v528 = vmax.f32 %v512, 0.0
    %v529 = vmax.f32 %v513, 0.0
    %v530 = vmax.f32 %v514, 0.0
    %v531 = vmax.f32 %v515, 0.0
    %v532 = vmax.f32 %v516, 0.0
    %v533 = vmax.f32 %v517, 0.0
    %v534 = vmax.f32 %v518, 0.0
    %v535 = vmax.f32 %v519, 0.0
    %v536 = vmax.f32 %v520, 0.0
    %v537 = vmax.f32 %v521, 0.0
    %v538 = vmax.f32 %v522, 0.0
    %v539 = vmax.f32 %v523, 0.0
    %v540 = vmax.f32 %v524, 0.0
    %v541 = vmax.f32 %v525, 0.0
    %542 = vst.msk [vmem:[#allocation2] sm:$0xff] %vm358, %v526
    %543 = vst.msk [vmem:[#allocation2 + $0x8] sm:$0xff] %vm358, %v527
    %544 = vst.msk [vmem:[#allocation2 + $0x10] sm:$0xff] %vm358, %v528
    %545 = vst.msk [vmem:[#allocation2 + $0x18] sm:$0xff] %vm358, %v529
    %546 = vst.msk [vmem:[#allocation2 + $0x20] sm:$0xff] %vm358, %v530
    %547 = vst.msk [vmem:[#allocation2 + $0x28] sm:$0xff] %vm358, %v531
    %548 = vst.msk [vmem:[#allocation2 + $0x30] sm:$0xff] %vm358, %v532
    %549 = vst.msk [vmem:[#allocation2 + $0x38] sm:$0xff] %vm358, %v533
    %550 = vst.msk [vmem:[#allocation2 + $0x40] sm:$0xff] %vm358, %v534
    %551 = vst.msk [vmem:[#allocation2 + $0x48] sm:$0xff] %vm358, %v535
    %552 = vst.msk [vmem:[#allocation2 + $0x50] sm:$0xff] %vm358, %v536
    %553 = vst.msk [vmem:[#allocation2 + $0x58] sm:$0xff] %vm358, %v537
    %554 = vst.msk [vmem:[#allocation2 + $0x60] sm:$0xff] %vm358, %v538
    %555 = vst.msk [vmem:[#allocation2 + $0x68] sm:$0xff] %vm358, %v539
    %556 = vst.msk [vmem:[#allocation2 + $0x70] sm:$0xff] %vm358, %v540
    %557 = vst.msk [vmem:[#allocation2 + $0x78] sm:$0xff] %vm358, %v541
    %v558 = vld [vmem:[#allocation2] ss:$2 sm:$0xff]
    %s559 = scalar_lea.vmem [#allocation2], 16
    %v560 = vld [vmem:[%s559] ss:$2 sm:$0xff]
    %s561 = scalar_lea.vmem [#allocation2], 32
    %v562 = vld [vmem:[%s561] ss:$2 sm:$0xff]
    %s563 = scalar_lea.vmem [#allocation2], 48
    %v564 = vld [vmem:[%s563] ss:$2 sm:$0xff]
    %s565 = scalar_lea.vmem [#allocation2], 64
    %v566 = vld [vmem:[%s565] ss:$2 sm:$0xff]
    %s567 = scalar_lea.vmem [#allocation2], 80
    %v568 = vld [vmem:[%s567] ss:$2 sm:$0xff]
    %s569 = scalar_lea.vmem [#allocation2], 96
    %v570 = vld [vmem:[%s569] ss:$2 sm:$0xff]
    %s571 = scalar_lea.vmem [#allocation2], 112
    %v572 = vld [vmem:[%s571] ss:$2 sm:$0xff]
    %v573 = vld [vmem:[%s2] sm:$0xf]
    %s574 = scalar_lea.vmem [#allocation2], 1
    %v575 = vld [vmem:[%s574] ss:$2 sm:$0xff]
    %s576 = scalar_lea.vmem [#allocation2], 17
    %v577 = vld [vmem:[%s576] ss:$2 sm:$0xff]
    %s578 = scalar_lea.vmem [#allocation2], 33
    %v579 = vld [vmem:[%s578] ss:$2 sm:$0xff]
    %s580 = scalar_lea.vmem [#allocation2], 49
    %v581 = vld [vmem:[%s580] ss:$2 sm:$0xff]
    %s582 = scalar_lea.vmem [#allocation2], 65
    %v583 = vld [vmem:[%s582] ss:$2 sm:$0xff]
    %s584 = scalar_lea.vmem [#allocation2], 81
    %v585 = vld [vmem:[%s584] ss:$2 sm:$0xff]
    %s586 = scalar_lea.vmem [#allocation2], 97
    %v587 = vld [vmem:[%s586] ss:$2 sm:$0xff]
    %s588 = scalar_lea.vmem [#allocation2], 113
    %v589 = vld [vmem:[%s588] ss:$2 sm:$0xff]
    %s590 = scalar_lea.vmem %s2, 4
    %v591 = vld [vmem:[%s590] sm:$0xf]
    %v593 = vsel %vm358, %v575, 0
    %v596 = vsel %vm358, %v577, 0
    %v599 = vsel %vm358, %v579, 0
    %v602 = vsel %vm358, %v581, 0
    %v605 = vsel %vm358, %v583, 0
    %v608 = vsel %vm358, %v585, 0
    %v611 = vsel %vm358, %v587, 0
    %v614 = vsel %vm358, %v589, 0
    %vm616 = vcmask 1043456
    %v618 = vsel %vm616, %v591, 0
    %620 = vmatprep.subr.mxu0 0.0
    %621 = vmatpush1.msra.mxu0 %v618
    %622 = vmatprep.subr.mxu0 0.0
    %623 = vmatpush1.msra.mxu0 0.0
    %624 = vmatprep.subr.mxu0 0.0
    %625 = vmatpush1.msra.mxu0 0.0
    %626 = vmatprep.subr.mxu0 0.0
    %627 = vmatpush1.msra.mxu0 0.0
    %628 = vmatprep.subr.mxu0 0.0
    %629 = vmatpush1.msra.mxu0 0.0
    %630 = vmatprep.subr.mxu0 0.0
    %631 = vmatpush1.msra.mxu0 0.0
    %632 = vmatprep.subr.mxu0 0.0
    %633 = vmatpush1.msra.mxu0 0.0
    %634 = vmatprep.subr.mxu0 0.0
    %635 = vmatpush1.msra.mxu0 0.0
    %636 = vmatprep.subr.mxu0 0.0
    %637 = vmatpush1.msra.mxu0 0.0
    %638 = vmatprep.subr.mxu0 0.0
    %639 = vmatpush1.msra.mxu0 0.0
    %640 = vmatprep.subr.mxu0 0.0
    %641 = vmatpush1.msra.mxu0 0.0
    %642 = vmatprep.subr.mxu0 0.0
    %643 = vmatpush1.msra.mxu0 0.0
    %644 = vmatprep.subr.mxu0 0.0
    %645 = vmatpush1.msra.mxu0 0.0
    %646 = vmatprep.subr.mxu0 0.0
    %647 = vmatpush1.msra.mxu0 0.0
    %648 = vmatprep.subr.mxu0 0.0
    %649 = vmatpush1.msra.mxu0 0.0
    %650 = vmatprep.subr.mxu0 0.0
    %651 = vmatpush1.msra.mxu0 0.0
    %652 = vmatprep.subr.mxu0 0.0
    %653 = vmatpush1.msra.mxu0 0.0
    %654 = vmatprep.subr.mxu0 0.0
    %655 = vmatpush1.msra.mxu0 0.0
    %656 = vmatprep.subr.mxu0 0.0
    %657 = vmatpush1.msra.mxu0 0.0
    %658 = vmatprep.subr.mxu0 0.0
    %659 = vmatpush1.msra.mxu0 0.0
    %660 = vmatprep.subr.mxu0 0.0
    %661 = vmatpush1.msra.mxu0 0.0
    %662 = vmatprep.subr.mxu0 0.0
    %663 = vmatpush1.msra.mxu0 0.0
    %664 = vmatprep.subr.mxu0 0.0
    %665 = vmatpush1.msra.mxu0 0.0
    %666 = vmatprep.subr.mxu0 0.0
    %667 = vmatpush1.msra.mxu0 0.0
    %668 = vmatprep.subr.mxu0 0.0
    %669 = vmatpush1.msra.mxu0 0.0
    %670 = vmatprep.subr.mxu0 0.0
    %671 = vmatpush1.msra.mxu0 0.0
    %672 = vmatprep.subr.mxu0 0.0
    %673 = vmatpush1.msra.mxu0 0.0
    %674 = vmatprep.subr.mxu0 0.0
    %675 = vmatpush1.msra.mxu0 0.0
    %676 = vmatprep.subr.mxu0 0.0
    %677 = vmatpush1.msra.mxu0 0.0
    %678 = vmatprep.subr.mxu0 0.0
    %679 = vmatpush1.msra.mxu0 0.0
    %680 = vmatprep.subr.mxu0 0.0
    %681 = vmatpush1.msra.mxu0 0.0
    %682 = vmatprep.subr.mxu0 0.0
    %683 = vmatpush1.msra.mxu0 0.0
    %684 = vmatprep.mubr.f32.mxu0 0.0
    %685 = vmatmul.mubr.f32.gmra.mrb[0].mxu0 %v593
    %v686 = vpop.f32.mrb[0].mxu0
    %v687 = vadd.f32 0.0, %v686
    %v688 = vpop.f32.mrb[0].mxu0
    %689 = vmatprep.mubr.f32.mxu0 0.0
    %690 = vmatmul.mubr.f32.gmra.mrb[0].mxu0 %v596
    %v691 = vpop.f32.mrb[0].mxu0
    %v692 = vadd.f32 0.0, %v691
    %v693 = vpop.f32.mrb[0].mxu0
    %694 = vmatprep.mubr.f32.mxu0 0.0
    %695 = vmatmul.mubr.f32.gmra.mrb[0].mxu0 %v599
    %v696 = vpop.f32.mrb[0].mxu0
    %v697 = vadd.f32 0.0, %v696
    %v698 = vpop.f32.mrb[0].mxu0
    %699 = vmatprep.mubr.f32.mxu0 0.0
    %700 = vmatmul.mubr.f32.gmra.mrb[0].mxu0 %v602
    %v701 = vpop.f32.mrb[0].mxu0
    %v702 = vadd.f32 0.0, %v701
    %v703 = vpop.f32.mrb[0].mxu0
    %704 = vmatprep.mubr.f32.mxu0 0.0
    %705 = vmatmul.mubr.f32.gmra.mrb[0].mxu0 %v605
    %v706 = vpop.f32.mrb[0].mxu0
    %v707 = vadd.f32 0.0, %v706
    %v708 = vpop.f32.mrb[0].mxu0
    %709 = vmatprep.mubr.f32.mxu0 0.0
    %710 = vmatmul.mubr.f32.gmra.mrb[0].mxu0 %v608
    %v711 = vpop.f32.mrb[0].mxu0
    %v712 = vadd.f32 0.0, %v711
    %v713 = vpop.f32.mrb[0].mxu0
    %714 = vmatprep.mubr.f32.mxu0 0.0
    %715 = vmatmul.mubr.f32.gmra.mrb[0].mxu0 %v611
    %v716 = vpop.f32.mrb[0].mxu0
    %v717 = vadd.f32 0.0, %v716
    %v718 = vpop.f32.mrb[0].mxu0
    %719 = vmatprep.mubr.f32.mxu0 0.0
    %720 = vmatmul.mubr.f32.gmra.mrb[0].mxu0 %v614
    %v721 = vpop.f32.mrb[0].mxu0
    %v722 = vadd.f32 0.0, %v721
    %v723 = vpop.f32.mrb[0].mxu0
    %724 = vdwg.mxu0
    %v726 = vsel %vm358, %v558, 0
    %v729 = vsel %vm358, %v560, 0
    %v732 = vsel %vm358, %v562, 0
    %v735 = vsel %vm358, %v564, 0
    %v738 = vsel %vm358, %v566, 0
    %v741 = vsel %vm358, %v568, 0
    %v744 = vsel %vm358, %v570, 0
    %v747 = vsel %vm358, %v572, 0
    %v750 = vsel %vm616, %v573, 0
    %752 = vmatprep.subr.mxu0 0.0
    %753 = vmatpush1.msra.mxu0 %v750
    %754 = vmatprep.subr.mxu0 0.0
    %755 = vmatpush1.msra.mxu0 0.0
    %756 = vmatprep.subr.mxu0 0.0
    %757 = vmatpush1.msra.mxu0 0.0
    %758 = vmatprep.subr.mxu0 0.0
    %759 = vmatpush1.msra.mxu0 0.0
    %760 = vmatprep.subr.mxu0 0.0
    %761 = vmatpush1.msra.mxu0 0.0
    %762 = vmatprep.subr.mxu0 0.0
    %763 = vmatpush1.msra.mxu0 0.0
    %764 = vmatprep.subr.mxu0 0.0
    %765 = vmatpush1.msra.mxu0 0.0
    %766 = vmatprep.subr.mxu0 0.0
    %767 = vmatpush1.msra.mxu0 0.0
    %768 = vmatprep.subr.mxu0 0.0
    %769 = vmatpush1.msra.mxu0 0.0
    %770 = vmatprep.subr.mxu0 0.0
    %771 = vmatpush1.msra.mxu0 0.0
    %772 = vmatprep.subr.mxu0 0.0
    %773 = vmatpush1.msra.mxu0 0.0
    %774 = vmatprep.subr.mxu0 0.0
    %775 = vmatpush1.msra.mxu0 0.0
    %776 = vmatprep.subr.mxu0 0.0
    %777 = vmatpush1.msra.mxu0 0.0
    %778 = vmatprep.subr.mxu0 0.0
    %779 = vmatpush1.msra.mxu0 0.0
    %780 = vmatprep.subr.mxu0 0.0
    %781 = vmatpush1.msra.mxu0 0.0
    %782 = vmatprep.subr.mxu0 0.0
    %783 = vmatpush1.msra.mxu0 0.0
    %784 = vmatprep.subr.mxu0 0.0
    %785 = vmatpush1.msra.mxu0 0.0
    %786 = vmatprep.subr.mxu0 0.0
    %787 = vmatpush1.msra.mxu0 0.0
    %788 = vmatprep.subr.mxu0 0.0
    %789 = vmatpush1.msra.mxu0 0.0
    %790 = vmatprep.subr.mxu0 0.0
    %791 = vmatpush1.msra.mxu0 0.0
    %792 = vmatprep.subr.mxu0 0.0
    %793 = vmatpush1.msra.mxu0 0.0
    %794 = vmatprep.subr.mxu0 0.0
    %795 = vmatpush1.msra.mxu0 0.0
    %796 = vmatprep.subr.mxu0 0.0
    %797 = vmatpush1.msra.mxu0 0.0
    %798 = vmatprep.subr.mxu0 0.0
    %799 = vmatpush1.msra.mxu0 0.0
    %800 = vmatprep.subr.mxu0 0.0
    %801 = vmatpush1.msra.mxu0 0.0
    %802 = vmatprep.subr.mxu0 0.0
    %803 = vmatpush1.msra.mxu0 0.0
    %804 = vmatprep.subr.mxu0 0.0
    %805 = vmatpush1.msra.mxu0 0.0
    %806 = vmatprep.subr.mxu0 0.0
    %807 = vmatpush1.msra.mxu0 0.0
    %808 = vmatprep.subr.mxu0 0.0
    %809 = vmatpush1.msra.mxu0 0.0
    %810 = vmatprep.subr.mxu0 0.0
    %811 = vmatpush1.msra.mxu0 0.0
    %812 = vmatprep.subr.mxu0 0.0
    %813 = vmatpush1.msra.mxu0 0.0
    %814 = vmatprep.subr.mxu0 0.0
    %815 = vmatpush1.msra.mxu0 0.0
    %816 = vmatprep.mubr.f32.mxu0 0.0
    %817 = vmatmul.mubr.f32.gmra.mrb[0].mxu0 %v726
    %v818 = vpop.f32.mrb[0].mxu0
    %v819 = vadd.f32 %v687, %v818
    %v820 = vpop.f32.mrb[0].mxu0
    %821 = vmatprep.mubr.f32.mxu0 0.0
    %822 = vmatmul.mubr.f32.gmra.mrb[0].mxu0 %v729
    %v823 = vpop.f32.mrb[0].mxu0
    %v824 = vadd.f32 %v692, %v823
    %v825 = vpop.f32.mrb[0].mxu0
    %826 = vmatprep.mubr.f32.mxu0 0.0
    %827 = vmatmul.mubr.f32.gmra.mrb[0].mxu0 %v732
    %v828 = vpop.f32.mrb[0].mxu0
    %v829 = vadd.f32 %v697, %v828
    %v830 = vpop.f32.mrb[0].mxu0
    %831 = vmatprep.mubr.f32.mxu0 0.0
    %832 = vmatmul.mubr.f32.gmra.mrb[0].mxu0 %v735
    %v833 = vpop.f32.mrb[0].mxu0
    %v834 = vadd.f32 %v702, %v833
    %v835 = vpop.f32.mrb[0].mxu0
    %836 = vmatprep.mubr.f32.mxu0 0.0
    %837 = vmatmul.mubr.f32.gmra.mrb[0].mxu0 %v738
    %v838 = vpop.f32.mrb[0].mxu0
    %v839 = vadd.f32 %v707, %v838
    %v840 = vpop.f32.mrb[0].mxu0
    %841 = vmatprep.mubr.f32.mxu0 0.0
    %842 = vmatmul.mubr.f32.gmra.mrb[0].mxu0 %v741
    %v843 = vpop.f32.mrb[0].mxu0
    %v844 = vadd.f32 %v712, %v843
    %v845 = vpop.f32.mrb[0].mxu0
    %846 = vmatprep.mubr.f32.mxu0 0.0
    %847 = vmatmul.mubr.f32.gmra.mrb[0].mxu0 %v744
    %v848 = vpop.f32.mrb[0].mxu0
    %v849 = vadd.f32 %v717, %v848
    %v850 = vpop.f32.mrb[0].mxu0
    %851 = vmatprep.mubr.f32.mxu0 0.0
    %852 = vmatmul.mubr.f32.gmra.mrb[0].mxu0 %v747
    %v853 = vpop.f32.mrb[0].mxu0
    %v854 = vadd.f32 %v722, %v853
    %v855 = vpop.f32.mrb[0].mxu0
    %856 = vdwg.mxu0
    %v857 = vld [vmem:[%s7] sm:$0x7]
    %v858 = vlaneseq
    %v859 = vshrl.u32 %v858, 7
    %v860 = vsub.s32 0, %v859
    %v861 = vrot.slane %v857, %v860
    %v862 = vadd.f32 %v819, %v861
    %v863 = vadd.f32 %v824, %v861
    %v864 = vadd.f32 %v829, %v861
    %v865 = vadd.f32 %v834, %v861
    %v866 = vadd.f32 %v839, %v861
    %v867 = vadd.f32 %v844, %v861
    %v868 = vadd.f32 %v849, %v861
    %v869 = vadd.f32 %v854, %v861
    %vm870 = vcmask 64512
    %v871 = vsel %vm870, %v862, 0.0
    %v872 = vsel %vm870, %v863, 0.0
    %v873 = vadd.f32 %v871, %v872
    %v874 = vsel %vm870, %v864, 0.0
    %v875 = vadd.f32 %v873, %v874
    %v876 = vsel %vm870, %v865, 0.0
    %v877 = vadd.f32 %v875, %v876
    %v878 = vsel %vm870, %v866, 0.0
    %v879 = vadd.f32 %v877, %v878
    %v880 = vsel %vm870, %v867, 0.0
    %v881 = vadd.f32 %v879, %v880
    %v882 = vsel %vm870, %v868, 0.0
    %v883 = vadd.f32 %v881, %v882
    %v884 = vsel %vm870, %v869, 0.0
    %v885 = vadd.f32 %v883, %v884
    %v886 = vrot.slane %v885, 4
    %v887 = vadd.f32 %v885, %v886
    %v888 = vrot.slane %v887, 2
    %v889 = vadd.f32 %v887, %v888
    %v890 = vrot.slane %v889, 1
    %v891 = vadd.f32 %v889, %v890
    %v892 = vrcp.pop 64.0
    %v893 = vmul.f32 %v891, %v892
    %v894 = vsub.f32 %v862, %v893
    %v895 = vsub.f32 %v863, %v893
    %v896 = vsub.f32 %v864, %v893
    %v897 = vsub.f32 %v865, %v893
    %v898 = vsub.f32 %v866, %v893
    %v899 = vsub.f32 %v867, %v893
    %v900 = vsub.f32 %v868, %v893
    %v901 = vsub.f32 %v869, %v893
    %v902 = vmul.f32 %v894, %v894
    %v903 = vmul.f32 %v895, %v895
    %v904 = vmul.f32 %v896, %v896
    %v905 = vmul.f32 %v897, %v897
    %v906 = vmul.f32 %v898, %v898
    %v907 = vmul.f32 %v899, %v899
    %v908 = vmul.f32 %v900, %v900
    %v909 = vmul.f32 %v901, %v901
    %v910 = vsel %vm870, %v902, 0.0
    %v911 = vsel %vm870, %v903, 0.0
    %v912 = vadd.f32 %v910, %v911
    %v913 = vsel %vm870, %v904, 0.0
    %v914 = vadd.f32 %v912, %v913
    %v915 = vsel %vm870, %v905, 0.0
    %v916 = vadd.f32 %v914, %v915
    %v917 = vsel %vm870, %v906, 0.0
    %v918 = vadd.f32 %v916, %v917
    %v919 = vsel %vm870, %v907, 0.0
    %v920 = vadd.f32 %v918, %v919
    %v921 = vsel %vm870, %v908, 0.0
    %v922 = vadd.f32 %v920, %v921
    %v923 = vsel %vm870, %v909, 0.0
    %v924 = vadd.f32 %v922, %v923
    %v925 = vrot.slane %v924, 4
    %v926 = vadd.f32 %v924, %v925
    %v927 = vrot.slane %v926, 2
    %v928 = vadd.f32 %v926, %v927
    %v929 = vrot.slane %v928, 1
    %v930 = vadd.f32 %v928, %v929
    %v931 = vmul.f32 %v930, %v892
    %v932 = vadd.f32 %v931, 1e-05
    %v933 = vrsqrt.pop %v932
    %v934 = vmul.f32 %v894, %v933
    %v935 = vmul.f32 %v895, %v933
    %v936 = vmul.f32 %v896, %v933
    %v937 = vmul.f32 %v897, %v933
    %v938 = vmul.f32 %v898, %v933
    %v939 = vmul.f32 %v899, %v933
    %v940 = vmul.f32 %v900, %v933
    %v941 = vmul.f32 %v901, %v933
    %v942 = vlaneseq
    %v943 = vshrl.u32 %v942, 7
    %v944 = vsub.s32 1, %v943
    %v945 = vrot.slane %v857, %v944
    %v946 = vmul.f32 %v945, %v934
    %v947 = vmul.f32 %v945, %v935
    %v948 = vmul.f32 %v945, %v936
    %v949 = vmul.f32 %v945, %v937
    %v950 = vmul.f32 %v945, %v938
    %v951 = vmul.f32 %v945, %v939
    %v952 = vmul.f32 %v945, %v940
    %v953 = vmul.f32 %v945, %v941
    %v954 = vlaneseq
    %v955 = vshrl.u32 %v954, 7
    %v956 = vsub.s32 2, %v955
    %v957 = vrot.slane %v857, %v956
    %v958 = vadd.f32 %v946, %v957
    %v959 = vadd.f32 %v947, %v957
    %v960 = vadd.f32 %v948, %v957
    %v961 = vadd.f32 %v949, %v957
    %v962 = vadd.f32 %v950, %v957
    %v963 = vadd.f32 %v951, %v957
    %v964 = vadd.f32 %v952, %v957
    %v965 = vadd.f32 %v953, %v957
    %v966 = vmax.f32 %v958, 0.0
    %v967 = vmax.f32 %v959, 0.0
    %v968 = vmax.f32 %v960, 0.0
    %v969 = vmax.f32 %v961, 0.0
    %v970 = vmax.f32 %v962, 0.0
    %v971 = vmax.f32 %v963, 0.0
    %v972 = vmax.f32 %v964, 0.0
    %v973 = vmax.f32 %v965, 0.0
    %974 = vst.msk [vmem:[#allocation3] sm:$0xff] %vm870, %v966
    %975 = vst.msk [vmem:[#allocation3 + $0x8] sm:$0xff] %vm870, %v967
    %976 = vst.msk [vmem:[#allocation3 + $0x10] sm:$0xff] %vm870, %v968
    %977 = vst.msk [vmem:[#allocation3 + $0x18] sm:$0xff] %vm870, %v969
    %978 = vst.msk [vmem:[#allocation3 + $0x20] sm:$0xff] %vm870, %v970
    %979 = vst.msk [vmem:[#allocation3 + $0x28] sm:$0xff] %vm870, %v971
    %980 = vst.msk [vmem:[#allocation3 + $0x30] sm:$0xff] %vm870, %v972
    %981 = vst.msk [vmem:[#allocation3 + $0x38] sm:$0xff] %vm870, %v973
    %v982 = vld [vmem:[#allocation3] ss:$2 sm:$0xff]
    %s983 = scalar_lea.vmem [#allocation3], 16
    %v984 = vld [vmem:[%s983] ss:$2 sm:$0xff]
    %s985 = scalar_lea.vmem [#allocation3], 32
    %v986 = vld [vmem:[%s985] ss:$2 sm:$0xff]
    %s987 = scalar_lea.vmem [#allocation3], 48
    %v988 = vld [vmem:[%s987] ss:$2 sm:$0xff]
    %v989 = vld [vmem:[%s3] sm:$0xff]
    %s990 = scalar_lea.vmem [#allocation3], 1
    %v991 = vld [vmem:[%s990] ss:$2 sm:$0xff]
    %s992 = scalar_lea.vmem [#allocation3], 17
    %v993 = vld [vmem:[%s992] ss:$2 sm:$0xff]
    %s994 = scalar_lea.vmem [#allocation3], 33
    %v995 = vld [vmem:[%s994] ss:$2 sm:$0xff]
    %s996 = scalar_lea.vmem [#allocation3], 49
    %v997 = vld [vmem:[%s996] ss:$2 sm:$0xff]
    %s998 = scalar_lea.vmem %s3, 8
    %v999 = vld [vmem:[%s998] sm:$0xff]
    %v1001 = vsel %vm870, %v991, 0
    %v1004 = vsel %vm870, %v993, 0
    %v1007 = vsel %vm870, %v995, 0
    %v1010 = vsel %vm870, %v997, 0
    %1012 = vmatprep.subr.mxu0 0.0
    %1013 = vmatpush1.msra.mxu0 %v999
    %1014 = vmatprep.subr.mxu0 0.0
    %1015 = vmatpush1.msra.mxu0 0.0
    %1016 = vmatprep.subr.mxu0 0.0
    %1017 = vmatpush1.msra.mxu0 0.0
    %1018 = vmatprep.subr.mxu0 0.0
    %1019 = vmatpush1.msra.mxu0 0.0
    %1020 = vmatprep.subr.mxu0 0.0
    %1021 = vmatpush1.msra.mxu0 0.0
    %1022 = vmatprep.subr.mxu0 0.0
    %1023 = vmatpush1.msra.mxu0 0.0
    %1024 = vmatprep.subr.mxu0 0.0
    %1025 = vmatpush1.msra.mxu0 0.0
    %1026 = vmatprep.subr.mxu0 0.0
    %1027 = vmatpush1.msra.mxu0 0.0
    %1028 = vmatprep.subr.mxu0 0.0
    %1029 = vmatpush1.msra.mxu0 0.0
    %1030 = vmatprep.subr.mxu0 0.0
    %1031 = vmatpush1.msra.mxu0 0.0
    %1032 = vmatprep.subr.mxu0 0.0
    %1033 = vmatpush1.msra.mxu0 0.0
    %1034 = vmatprep.subr.mxu0 0.0
    %1035 = vmatpush1.msra.mxu0 0.0
    %1036 = vmatprep.subr.mxu0 0.0
    %1037 = vmatpush1.msra.mxu0 0.0
    %1038 = vmatprep.subr.mxu0 0.0
    %1039 = vmatpush1.msra.mxu0 0.0
    %1040 = vmatprep.subr.mxu0 0.0
    %1041 = vmatpush1.msra.mxu0 0.0
    %1042 = vmatprep.subr.mxu0 0.0
    %1043 = vmatpush1.msra.mxu0 0.0
    %1044 = vmatprep.subr.mxu0 0.0
    %1045 = vmatpush1.msra.mxu0 0.0
    %1046 = vmatprep.subr.mxu0 0.0
    %1047 = vmatpush1.msra.mxu0 0.0
    %1048 = vmatprep.subr.mxu0 0.0
    %1049 = vmatpush1.msra.mxu0 0.0
    %1050 = vmatprep.subr.mxu0 0.0
    %1051 = vmatpush1.msra.mxu0 0.0
    %1052 = vmatprep.subr.mxu0 0.0
    %1053 = vmatpush1.msra.mxu0 0.0
    %1054 = vmatprep.subr.mxu0 0.0
    %1055 = vmatpush1.msra.mxu0 0.0
    %1056 = vmatprep.subr.mxu0 0.0
    %1057 = vmatpush1.msra.mxu0 0.0
    %1058 = vmatprep.subr.mxu0 0.0
    %1059 = vmatpush1.msra.mxu0 0.0
    %1060 = vmatprep.subr.mxu0 0.0
    %1061 = vmatpush1.msra.mxu0 0.0
    %1062 = vmatprep.subr.mxu0 0.0
    %1063 = vmatpush1.msra.mxu0 0.0
    %1064 = vmatprep.subr.mxu0 0.0
    %1065 = vmatpush1.msra.mxu0 0.0
    %1066 = vmatprep.subr.mxu0 0.0
    %1067 = vmatpush1.msra.mxu0 0.0
    %1068 = vmatprep.subr.mxu0 0.0
    %1069 = vmatpush1.msra.mxu0 0.0
    %1070 = vmatprep.subr.mxu0 0.0
    %1071 = vmatpush1.msra.mxu0 0.0
    %1072 = vmatprep.subr.mxu0 0.0
    %1073 = vmatpush1.msra.mxu0 0.0
    %1074 = vmatprep.subr.mxu0 0.0
    %1075 = vmatpush1.msra.mxu0 0.0
    %1076 = vmatprep.mubr.f32.mxu0 0.0
    %1077 = vmatmul.mubr.f32.gmra.mrb[0].mxu0 %v1001
    %v1078 = vpop.f32.mrb[0].mxu0
    %v1079 = vadd.f32 0.0, %v1078
    %v1080 = vpop.f32.mrb[0].mxu0
    %1081 = vmatprep.mubr.f32.mxu0 0.0
    %1082 = vmatmul.mubr.f32.gmra.mrb[0].mxu0 %v1004
    %v1083 = vpop.f32.mrb[0].mxu0
    %v1084 = vadd.f32 0.0, %v1083
    %v1085 = vpop.f32.mrb[0].mxu0
    %1086 = vmatprep.mubr.f32.mxu0 0.0
    %1087 = vmatmul.mubr.f32.gmra.mrb[0].mxu0 %v1007
    %v1088 = vpop.f32.mrb[0].mxu0
    %v1089 = vadd.f32 0.0, %v1088
    %v1090 = vpop.f32.mrb[0].mxu0
    %1091 = vmatprep.mubr.f32.mxu0 0.0
    %1092 = vmatmul.mubr.f32.gmra.mrb[0].mxu0 %v1010
    %v1093 = vpop.f32.mrb[0].mxu0
    %v1094 = vadd.f32 0.0, %v1093
    %v1095 = vpop.f32.mrb[0].mxu0
    %1096 = vdwg.mxu0
    %v1098 = vsel %vm870, %v982, 0
    %v1101 = vsel %vm870, %v984, 0
    %v1104 = vsel %vm870, %v986, 0
    %v1107 = vsel %vm870, %v988, 0
    %1109 = vmatprep.subr.mxu0 0.0
    %1110 = vmatpush1.msra.mxu0 %v989
    %1111 = vmatprep.subr.mxu0 0.0
    %1112 = vmatpush1.msra.mxu0 0.0
    %1113 = vmatprep.subr.mxu0 0.0
    %1114 = vmatpush1.msra.mxu0 0.0
    %1115 = vmatprep.subr.mxu0 0.0
    %1116 = vmatpush1.msra.mxu0 0.0
    %1117 = vmatprep.subr.mxu0 0.0
    %1118 = vmatpush1.msra.mxu0 0.0
    %1119 = vmatprep.subr.mxu0 0.0
    %1120 = vmatpush1.msra.mxu0 0.0
    %1121 = vmatprep.subr.mxu0 0.0
    %1122 = vmatpush1.msra.mxu0 0.0
    %1123 = vmatprep.subr.mxu0 0.0
    %1124 = vmatpush1.msra.mxu0 0.0
    %1125 = vmatprep.subr.mxu0 0.0
    %1126 = vmatpush1.msra.mxu0 0.0
    %1127 = vmatprep.subr.mxu0 0.0
    %1128 = vmatpush1.msra.mxu0 0.0
    %1129 = vmatprep.subr.mxu0 0.0
    %1130 = vmatpush1.msra.mxu0 0.0
    %1131 = vmatprep.subr.mxu0 0.0
    %1132 = vmatpush1.msra.mxu0 0.0
    %1133 = vmatprep.subr.mxu0 0.0
    %1134 = vmatpush1.msra.mxu0 0.0
    %1135 = vmatprep.subr.mxu0 0.0
    %1136 = vmatpush1.msra.mxu0 0.0
    %1137 = vmatprep.subr.mxu0 0.0
    %1138 = vmatpush1.msra.mxu0 0.0
    %1139 = vmatprep.subr.mxu0 0.0
    %1140 = vmatpush1.msra.mxu0 0.0
    %1141 = vmatprep.subr.mxu0 0.0
    %1142 = vmatpush1.msra.mxu0 0.0
    %1143 = vmatprep.subr.mxu0 0.0
    %1144 = vmatpush1.msra.mxu0 0.0
    %1145 = vmatprep.subr.mxu0 0.0
    %1146 = vmatpush1.msra.mxu0 0.0
    %1147 = vmatprep.subr.mxu0 0.0
    %1148 = vmatpush1.msra.mxu0 0.0
    %1149 = vmatprep.subr.mxu0 0.0
    %1150 = vmatpush1.msra.mxu0 0.0
    %1151 = vmatprep.subr.mxu0 0.0
    %1152 = vmatpush1.msra.mxu0 0.0
    %1153 = vmatprep.subr.mxu0 0.0
    %1154 = vmatpush1.msra.mxu0 0.0
    %1155 = vmatprep.subr.mxu0 0.0
    %1156 = vmatpush1.msra.mxu0 0.0
    %1157 = vmatprep.subr.mxu0 0.0
    %1158 = vmatpush1.msra.mxu0 0.0
    %1159 = vmatprep.subr.mxu0 0.0
    %1160 = vmatpush1.msra.mxu0 0.0
    %1161 = vmatprep.subr.mxu0 0.0
    %1162 = vmatpush1.msra.mxu0 0.0
    %1163 = vmatprep.subr.mxu0 0.0
    %1164 = vmatpush1.msra.mxu0 0.0
    %1165 = vmatprep.subr.mxu0 0.0
    %1166 = vmatpush1.msra.mxu0 0.0
    %1167 = vmatprep.subr.mxu0 0.0
    %1168 = vmatpush1.msra.mxu0 0.0
    %1169 = vmatprep.subr.mxu0 0.0
    %1170 = vmatpush1.msra.mxu0 0.0
    %1171 = vmatprep.subr.mxu0 0.0
    %1172 = vmatpush1.msra.mxu0 0.0
    %1173 = vmatprep.mubr.f32.mxu0 0.0
    %1174 = vmatmul.mubr.f32.gmra.mrb[0].mxu0 %v1098
    %v1175 = vpop.f32.mrb[0].mxu0
    %v1176 = vadd.f32 %v1079, %v1175
    %v1177 = vpop.f32.mrb[0].mxu0
    %1178 = vmatprep.mubr.f32.mxu0 0.0
    %1179 = vmatmul.mubr.f32.gmra.mrb[0].mxu0 %v1101
    %v1180 = vpop.f32.mrb[0].mxu0
    %v1181 = vadd.f32 %v1084, %v1180
    %v1182 = vpop.f32.mrb[0].mxu0
    %1183 = vmatprep.mubr.f32.mxu0 0.0
    %1184 = vmatmul.mubr.f32.gmra.mrb[0].mxu0 %v1104
    %v1185 = vpop.f32.mrb[0].mxu0
    %v1186 = vadd.f32 %v1089, %v1185
    %v1187 = vpop.f32.mrb[0].mxu0
    %1188 = vmatprep.mubr.f32.mxu0 0.0
    %1189 = vmatmul.mubr.f32.gmra.mrb[0].mxu0 %v1107
    %v1190 = vpop.f32.mrb[0].mxu0
    %v1191 = vadd.f32 %v1094, %v1190
    %v1192 = vpop.f32.mrb[0].mxu0
    %1193 = vdwg.mxu0
    %v1194 = vld [vmem:[%s8] sm:$0x7]
    %v1195 = vlaneseq
    %v1196 = vshrl.u32 %v1195, 7
    %v1197 = vsub.s32 0, %v1196
    %v1198 = vrot.slane %v1194, %v1197
    %v1199 = vadd.f32 %v1176, %v1198
    %v1200 = vadd.f32 %v1181, %v1198
    %v1201 = vadd.f32 %v1186, %v1198
    %v1202 = vadd.f32 %v1191, %v1198
    %vm1203 = vcmask 130048
    %v1204 = vsel %vm1203, %v1199, 0.0
    %v1205 = vsel %vm1203, %v1200, 0.0
    %v1206 = vadd.f32 %v1204, %v1205
    %v1207 = vsel %vm1203, %v1201, 0.0
    %v1208 = vadd.f32 %v1206, %v1207
    %v1209 = vsel %vm1203, %v1202, 0.0
    %v1210 = vadd.f32 %v1208, %v1209
    %v1211 = vrot.slane %v1210, 4
    %v1212 = vadd.f32 %v1210, %v1211
    %v1213 = vrot.slane %v1212, 2
    %v1214 = vadd.f32 %v1212, %v1213
    %v1215 = vrot.slane %v1214, 1
    %v1216 = vadd.f32 %v1214, %v1215
    %v1217 = vrcp.pop 32.0
    %v1218 = vmul.f32 %v1216, %v1217
    %v1219 = vsub.f32 %v1199, %v1218
    %v1220 = vsub.f32 %v1200, %v1218
    %v1221 = vsub.f32 %v1201, %v1218
    %v1222 = vsub.f32 %v1202, %v1218
    %v1223 = vmul.f32 %v1219, %v1219
    %v1224 = vmul.f32 %v1220, %v1220
    %v1225 = vmul.f32 %v1221, %v1221
    %v1226 = vmul.f32 %v1222, %v1222
    %v1227 = vsel %vm1203, %v1223, 0.0
    %v1228 = vsel %vm1203, %v1224, 0.0
    %v1229 = vadd.f32 %v1227, %v1228
    %v1230 = vsel %vm1203, %v1225, 0.0
    %v1231 = vadd.f32 %v1229, %v1230
    %v1232 = vsel %vm1203, %v1226, 0.0
    %v1233 = vadd.f32 %v1231, %v1232
    %v1234 = vrot.slane %v1233, 4
    %v1235 = vadd.f32 %v1233, %v1234
    %v1236 = vrot.slane %v1235, 2
    %v1237 = vadd.f32 %v1235, %v1236
    %v1238 = vrot.slane %v1237, 1
    %v1239 = vadd.f32 %v1237, %v1238
    %v1240 = vmul.f32 %v1239, %v1217
    %v1241 = vadd.f32 %v1240, 1e-05
    %v1242 = vrsqrt.pop %v1241
    %v1243 = vmul.f32 %v1219, %v1242
    %v1244 = vmul.f32 %v1220, %v1242
    %v1245 = vmul.f32 %v1221, %v1242
    %v1246 = vmul.f32 %v1222, %v1242
    %v1247 = vlaneseq
    %v1248 = vshrl.u32 %v1247, 7
    %v1249 = vsub.s32 1, %v1248
    %v1250 = vrot.slane %v1194, %v1249
    %v1251 = vmul.f32 %v1250, %v1243
    %v1252 = vmul.f32 %v1250, %v1244
    %v1253 = vmul.f32 %v1250, %v1245
    %v1254 = vmul.f32 %v1250, %v1246
    %v1255 = vlaneseq
    %v1256 = vshrl.u32 %v1255, 7
    %v1257 = vsub.s32 2, %v1256
    %v1258 = vrot.slane %v1194, %v1257
    %v1259 = vadd.f32 %v1251, %v1258
    %v1260 = vadd.f32 %v1252, %v1258
    %v1261 = vadd.f32 %v1253, %v1258
    %v1262 = vadd.f32 %v1254, %v1258
    %v1263 = vmax.f32 %v1259, 0.0
    %v1264 = vmax.f32 %v1260, 0.0
    %v1265 = vmax.f32 %v1261, 0.0
    %v1266 = vmax.f32 %v1262, 0.0
    %1267 = vst.msk [vmem:[#allocation4] sm:$0xff] %vm1203, %v1263
    %1268 = vst.msk [vmem:[#allocation4 + $0x8] sm:$0xff] %vm1203, %v1264
    %1269 = vst.msk [vmem:[#allocation4 + $0x10] sm:$0xff] %vm1203, %v1265
    %1270 = vst.msk [vmem:[#allocation4 + $0x18] sm:$0xff] %vm1203, %v1266
    %v1271 = vld [vmem:[#allocation4] ss:$2 sm:$0xff]
    %s1272 = scalar_lea.vmem [#allocation4], 16
    %v1273 = vld [vmem:[%s1272] ss:$2 sm:$0xff]
    %v1274 = vld [vmem:[%s4] sm:$0xff]
    %v1275 = vld [vmem:[%s4 + $0x8] sm:$0xff]
    %s1276 = scalar_lea.vmem [#allocation4], 1
    %v1277 = vld [vmem:[%s1276] ss:$2 sm:$0xff]
    %s1278 = scalar_lea.vmem [#allocation4], 17
    %v1279 = vld [vmem:[%s1278] ss:$2 sm:$0xff]
    %s1280 = scalar_lea.vmem %s4, 16
    %v1281 = vld [vmem:[%s1280] sm:$0xff]
    %v1282 = vld [vmem:[%s1280 + $0x8] sm:$0xff]
    %v1284 = vsel %vm1203, %v1277, 0
    %v1287 = vsel %vm1203, %v1279, 0
    %1289 = vmatprep.subr.mxu0 0.0
    %1290 = vmatpush1.msra.mxu0 %v1281
    %1291 = vmatprep.subr.mxu0 0.0
    %1292 = vmatpush1.msra.mxu0 %v1282
    %1293 = vmatprep.subr.mxu0 0.0
    %1294 = vmatpush1.msra.mxu0 0.0
    %1295 = vmatprep.subr.mxu0 0.0
    %1296 = vmatpush1.msra.mxu0 0.0
    %1297 = vmatprep.subr.mxu0 0.0
    %1298 = vmatpush1.msra.mxu0 0.0
    %1299 = vmatprep.subr.mxu0 0.0
    %1300 = vmatpush1.msra.mxu0 0.0
    %1301 = vmatprep.subr.mxu0 0.0
    %1302 = vmatpush1.msra.mxu0 0.0
    %1303 = vmatprep.subr.mxu0 0.0
    %1304 = vmatpush1.msra.mxu0 0.0
    %1305 = vmatprep.subr.mxu0 0.0
    %1306 = vmatpush1.msra.mxu0 0.0
    %1307 = vmatprep.subr.mxu0 0.0
    %1308 = vmatpush1.msra.mxu0 0.0
    %1309 = vmatprep.subr.mxu0 0.0
    %1310 = vmatpush1.msra.mxu0 0.0
    %1311 = vmatprep.subr.mxu0 0.0
    %1312 = vmatpush1.msra.mxu0 0.0
    %1313 = vmatprep.subr.mxu0 0.0
    %1314 = vmatpush1.msra.mxu0 0.0
    %1315 = vmatprep.subr.mxu0 0.0
    %1316 = vmatpush1.msra.mxu0 0.0
    %1317 = vmatprep.subr.mxu0 0.0
    %1318 = vmatpush1.msra.mxu0 0.0
    %1319 = vmatprep.subr.mxu0 0.0
    %1320 = vmatpush1.msra.mxu0 0.0
    %1321 = vmatprep.subr.mxu0 0.0
    %1322 = vmatpush1.msra.mxu0 0.0
    %1323 = vmatprep.subr.mxu0 0.0
    %1324 = vmatpush1.msra.mxu0 0.0
    %1325 = vmatprep.subr.mxu0 0.0
    %1326 = vmatpush1.msra.mxu0 0.0
    %1327 = vmatprep.subr.mxu0 0.0
    %1328 = vmatpush1.msra.mxu0 0.0
    %1329 = vmatprep.subr.mxu0 0.0
    %1330 = vmatpush1.msra.mxu0 0.0
    %1331 = vmatprep.subr.mxu0 0.0
    %1332 = vmatpush1.msra.mxu0 0.0
    %1333 = vmatprep.subr.mxu0 0.0
    %1334 = vmatpush1.msra.mxu0 0.0
    %1335 = vmatprep.subr.mxu0 0.0
    %1336 = vmatpush1.msra.mxu0 0.0
    %1337 = vmatprep.subr.mxu0 0.0
    %1338 = vmatpush1.msra.mxu0 0.0
    %1339 = vmatprep.subr.mxu0 0.0
    %1340 = vmatpush1.msra.mxu0 0.0
    %1341 = vmatprep.subr.mxu0 0.0
    %1342 = vmatpush1.msra.mxu0 0.0
    %1343 = vmatprep.subr.mxu0 0.0
    %1344 = vmatpush1.msra.mxu0 0.0
    %1345 = vmatprep.subr.mxu0 0.0
    %1346 = vmatpush1.msra.mxu0 0.0
    %1347 = vmatprep.subr.mxu0 0.0
    %1348 = vmatpush1.msra.mxu0 0.0
    %1349 = vmatprep.subr.mxu0 0.0
    %1350 = vmatpush1.msra.mxu0 0.0
    %1351 = vmatprep.subr.mxu0 0.0
    %1352 = vmatpush1.msra.mxu0 0.0
    %1353 = vmatprep.mubr.f32.mxu0 0.0
    %1354 = vmatmul.mubr.f32.gmra.mrb[0].mxu0 %v1284
    %v1355 = vpop.f32.mrb[0].mxu0
    %v1356 = vadd.f32 0.0, %v1355
    %v1357 = vpop.f32.mrb[0].mxu0
    %1358 = vmatprep.mubr.f32.mxu0 0.0
    %1359 = vmatmul.mubr.f32.gmra.mrb[0].mxu0 %v1287
    %v1360 = vpop.f32.mrb[0].mxu0
    %v1361 = vadd.f32 0.0, %v1360
    %v1362 = vpop.f32.mrb[0].mxu0
    %1363 = vdwg.mxu0
    %v1365 = vsel %vm1203, %v1271, 0
    %v1368 = vsel %vm1203, %v1273, 0
    %1370 = vmatprep.subr.mxu0 0.0
    %1371 = vmatpush1.msra.mxu0 %v1274
    %1372 = vmatprep.subr.mxu0 0.0
    %1373 = vmatpush1.msra.mxu0 %v1275
    %1374 = vmatprep.subr.mxu0 0.0
    %1375 = vmatpush1.msra.mxu0 0.0
    %1376 = vmatprep.subr.mxu0 0.0
    %1377 = vmatpush1.msra.mxu0 0.0
    %1378 = vmatprep.subr.mxu0 0.0
    %1379 = vmatpush1.msra.mxu0 0.0
    %1380 = vmatprep.subr.mxu0 0.0
    %1381 = vmatpush1.msra.mxu0 0.0
    %1382 = vmatprep.subr.mxu0 0.0
    %1383 = vmatpush1.msra.mxu0 0.0
    %1384 = vmatprep.subr.mxu0 0.0
    %1385 = vmatpush1.msra.mxu0 0.0
    %1386 = vmatprep.subr.mxu0 0.0
    %1387 = vmatpush1.msra.mxu0 0.0
    %1388 = vmatprep.subr.mxu0 0.0
    %1389 = vmatpush1.msra.mxu0 0.0
    %1390 = vmatprep.subr.mxu0 0.0
    %1391 = vmatpush1.msra.mxu0 0.0
    %1392 = vmatprep.subr.mxu0 0.0
    %1393 = vmatpush1.msra.mxu0 0.0
    %1394 = vmatprep.subr.mxu0 0.0
    %1395 = vmatpush1.msra.mxu0 0.0
    %1396 = vmatprep.subr.mxu0 0.0
    %1397 = vmatpush1.msra.mxu0 0.0
    %1398 = vmatprep.subr.mxu0 0.0
    %1399 = vmatpush1.msra.mxu0 0.0
    %1400 = vmatprep.subr.mxu0 0.0
    %1401 = vmatpush1.msra.mxu0 0.0
    %1402 = vmatprep.subr.mxu0 0.0
    %1403 = vmatpush1.msra.mxu0 0.0
    %1404 = vmatprep.subr.mxu0 0.0
    %1405 = vmatpush1.msra.mxu0 0.0
    %1406 = vmatprep.subr.mxu0 0.0
    %1407 = vmatpush1.msra.mxu0 0.0
    %1408 = vmatprep.subr.mxu0 0.0
    %1409 = vmatpush1.msra.mxu0 0.0
    %1410 = vmatprep.subr.mxu0 0.0
    %1411 = vmatpush1.msra.mxu0 0.0
    %1412 = vmatprep.subr.mxu0 0.0
    %1413 = vmatpush1.msra.mxu0 0.0
    %1414 = vmatprep.subr.mxu0 0.0
    %1415 = vmatpush1.msra.mxu0 0.0
    %1416 = vmatprep.subr.mxu0 0.0
    %1417 = vmatpush1.msra.mxu0 0.0
    %1418 = vmatprep.subr.mxu0 0.0
    %1419 = vmatpush1.msra.mxu0 0.0
    %1420 = vmatprep.subr.mxu0 0.0
    %1421 = vmatpush1.msra.mxu0 0.0
    %1422 = vmatprep.subr.mxu0 0.0
    %1423 = vmatpush1.msra.mxu0 0.0
    %1424 = vmatprep.subr.mxu0 0.0
    %1425 = vmatpush1.msra.mxu0 0.0
    %1426 = vmatprep.subr.mxu0 0.0
    %1427 = vmatpush1.msra.mxu0 0.0
    %1428 = vmatprep.subr.mxu0 0.0
    %1429 = vmatpush1.msra.mxu0 0.0
    %1430 = vmatprep.subr.mxu0 0.0
    %1431 = vmatpush1.msra.mxu0 0.0
    %1432 = vmatprep.subr.mxu0 0.0
    %1433 = vmatpush1.msra.mxu0 0.0
    %1434 = vmatprep.mubr.f32.mxu0 0.0
    %1435 = vmatmul.mubr.f32.gmra.mrb[0].mxu0 %v1365
    %v1436 = vpop.f32.mrb[0].mxu0
    %v1437 = vadd.f32 %v1356, %v1436
    %v1438 = vpop.f32.mrb[0].mxu0
    %1439 = vmatprep.mubr.f32.mxu0 0.0
    %1440 = vmatmul.mubr.f32.gmra.mrb[0].mxu0 %v1368
    %v1441 = vpop.f32.mrb[0].mxu0
    %v1442 = vadd.f32 %v1361, %v1441
    %v1443 = vpop.f32.mrb[0].mxu0
    %1444 = vdwg.mxu0
    %v1445 = vld [vmem:[%s9] sm:$0x7]
    %v1446 = vlaneseq
    %v1447 = vshrl.u32 %v1446, 7
    %v1448 = vsub.s32 0, %v1447
    %v1449 = vrot.slane %v1445, %v1448
    %v1450 = vadd.f32 %v1437, %v1449
    %v1451 = vadd.f32 %v1442, %v1449
    %vm1452 = vcmask 261120
    %v1453 = vsel %vm1452, %v1450, 0.0
    %v1454 = vsel %vm1452, %v1451, 0.0
    %v1455 = vadd.f32 %v1453, %v1454
    %v1456 = vrot.slane %v1455, 4
    %v1457 = vadd.f32 %v1455, %v1456
    %v1458 = vrot.slane %v1457, 2
    %v1459 = vadd.f32 %v1457, %v1458
    %v1460 = vrot.slane %v1459, 1
    %v1461 = vadd.f32 %v1459, %v1460
    %v1462 = vrcp.pop 16.0
    %v1463 = vmul.f32 %v1461, %v1462
    %v1464 = vsub.f32 %v1450, %v1463
    %v1465 = vsub.f32 %v1451, %v1463
    %v1466 = vmul.f32 %v1464, %v1464
    %v1467 = vmul.f32 %v1465, %v1465
    %v1468 = vsel %vm1452, %v1466, 0.0
    %v1469 = vsel %vm1452, %v1467, 0.0
    %v1470 = vadd.f32 %v1468, %v1469
    %v1471 = vrot.slane %v1470, 4
    %v1472 = vadd.f32 %v1470, %v1471
    %v1473 = vrot.slane %v1472, 2
    %v1474 = vadd.f32 %v1472, %v1473
    %v1475 = vrot.slane %v1474, 1
    %v1476 = vadd.f32 %v1474, %v1475
    %v1477 = vmul.f32 %v1476, %v1462
    %v1478 = vadd.f32 %v1477, 1e-05
    %v1479 = vrsqrt.pop %v1478
    %v1480 = vmul.f32 %v1464, %v1479
    %v1481 = vmul.f32 %v1465, %v1479
    %v1482 = vlaneseq
    %v1483 = vshrl.u32 %v1482, 7
    %v1484 = vsub.s32 1, %v1483
    %v1485 = vrot.slane %v1445, %v1484
    %v1486 = vmul.f32 %v1485, %v1480
    %v1487 = vmul.f32 %v1485, %v1481
    %v1488 = vlaneseq
    %v1489 = vshrl.u32 %v1488, 7
    %v1490 = vsub.s32 2, %v1489
    %v1491 = vrot.slane %v1445, %v1490
    %v1492 = vadd.f32 %v1486, %v1491
    %v1493 = vadd.f32 %v1487, %v1491
    %v1494 = vmax.f32 %v1492, 0.0
    %v1495 = vmax.f32 %v1493, 0.0
    %1496 = vst.msk [vmem:[#allocation5] sm:$0xff] %vm1452, %v1494
    %1497 = vst.msk [vmem:[#allocation5 + $0x8] sm:$0xff] %vm1452, %v1495
    %v1498 = vld [vmem:[#allocation5] ss:$2 sm:$0xff]
    %v1499 = vld [vmem:[%s5] sm:$0xff]
    %v1500 = vld [vmem:[%s5 + $0x8] sm:$0xff]
    %v1501 = vld [vmem:[%s5 + $0x10] sm:$0xff]
    %v1502 = vld [vmem:[%s5 + $0x18] sm:$0xff]
    %s1503 = scalar_lea.vmem [#allocation5], 1
    %v1504 = vld [vmem:[%s1503] ss:$2 sm:$0xff]
    %s1505 = scalar_lea.vmem %s5, 32
    %v1506 = vld [vmem:[%s1505] sm:$0xff]
    %v1507 = vld [vmem:[%s1505 + $0x8] sm:$0xff]
    %v1508 = vld [vmem:[%s1505 + $0x10] sm:$0xff]
    %v1509 = vld [vmem:[%s1505 + $0x18] sm:$0xff]
    %v1511 = vsel %vm1452, %v1504, 0
    %1513 = vmatprep.subr.mxu0 0.0
    %1514 = vmatpush1.msra.mxu0 %v1506
    %1515 = vmatprep.subr.mxu0 0.0
    %1516 = vmatpush1.msra.mxu0 %v1507
    %1517 = vmatprep.subr.mxu0 0.0
    %1518 = vmatpush1.msra.mxu0 %v1508
    %1519 = vmatprep.subr.mxu0 0.0
    %1520 = vmatpush1.msra.mxu0 %v1509
    %1521 = vmatprep.subr.mxu0 0.0
    %1522 = vmatpush1.msra.mxu0 0.0
    %1523 = vmatprep.subr.mxu0 0.0
    %1524 = vmatpush1.msra.mxu0 0.0
    %1525 = vmatprep.subr.mxu0 0.0
    %1526 = vmatpush1.msra.mxu0 0.0
    %1527 = vmatprep.subr.mxu0 0.0
    %1528 = vmatpush1.msra.mxu0 0.0
    %1529 = vmatprep.subr.mxu0 0.0
    %1530 = vmatpush1.msra.mxu0 0.0
    %1531 = vmatprep.subr.mxu0 0.0
    %1532 = vmatpush1.msra.mxu0 0.0
    %1533 = vmatprep.subr.mxu0 0.0
    %1534 = vmatpush1.msra.mxu0 0.0
    %1535 = vmatprep.subr.mxu0 0.0
    %1536 = vmatpush1.msra.mxu0 0.0
    %1537 = vmatprep.subr.mxu0 0.0
    %1538 = vmatpush1.msra.mxu0 0.0
    %1539 = vmatprep.subr.mxu0 0.0
    %1540 = vmatpush1.msra.mxu0 0.0
    %1541 = vmatprep.subr.mxu0 0.0
    %1542 = vmatpush1.msra.mxu0 0.0
    %1543 = vmatprep.subr.mxu0 0.0
    %1544 = vmatpush1.msra.mxu0 0.0
    %1545 = vmatprep.subr.mxu0 0.0
    %1546 = vmatpush1.msra.mxu0 0.0
    %1547 = vmatprep.subr.mxu0 0.0
    %1548 = vmatpush1.msra.mxu0 0.0
    %1549 = vmatprep.subr.mxu0 0.0
    %1550 = vmatpush1.msra.mxu0 0.0
    %1551 = vmatprep.subr.mxu0 0.0
    %1552 = vmatpush1.msra.mxu0 0.0
    %1553 = vmatprep.subr.mxu0 0.0
    %1554 = vmatpush1.msra.mxu0 0.0
    %1555 = vmatprep.subr.mxu0 0.0
    %1556 = vmatpush1.msra.mxu0 0.0
    %1557 = vmatprep.subr.mxu0 0.0
    %1558 = vmatpush1.msra.mxu0 0.0
    %1559 = vmatprep.subr.mxu0 0.0
    %1560 = vmatpush1.msra.mxu0 0.0
    %1561 = vmatprep.subr.mxu0 0.0
    %1562 = vmatpush1.msra.mxu0 0.0
    %1563 = vmatprep.subr.mxu0 0.0
    %1564 = vmatpush1.msra.mxu0 0.0
    %1565 = vmatprep.subr.mxu0 0.0
    %1566 = vmatpush1.msra.mxu0 0.0
    %1567 = vmatprep.subr.mxu0 0.0
    %1568 = vmatpush1.msra.mxu0 0.0
    %1569 = vmatprep.subr.mxu0 0.0
    %1570 = vmatpush1.msra.mxu0 0.0
    %1571 = vmatprep.subr.mxu0 0.0
    %1572 = vmatpush1.msra.mxu0 0.0
    %1573 = vmatprep.subr.mxu0 0.0
    %1574 = vmatpush1.msra.mxu0 0.0
    %1575 = vmatprep.subr.mxu0 0.0
    %1576 = vmatpush1.msra.mxu0 0.0
    %1577 = vmatprep.mubr.f32.mxu0 0.0
    %1578 = vmatmul.mubr.f32.gmra.mrb[0].mxu0 %v1511
    %v1579 = vpop.f32.mrb[0].mxu0
    %v1580 = vadd.f32 0.0, %v1579
    %v1581 = vpop.f32.mrb[0].mxu0
    %1582 = vdwg.mxu0
    %v1584 = vsel %vm1452, %v1498, 0
    %1586 = vmatprep.subr.mxu0 0.0
    %1587 = vmatpush1.msra.mxu0 %v1499
    %1588 = vmatprep.subr.mxu0 0.0
    %1589 = vmatpush1.msra.mxu0 %v1500
    %1590 = vmatprep.subr.mxu0 0.0
    %1591 = vmatpush1.msra.mxu0 %v1501
    %1592 = vmatprep.subr.mxu0 0.0
    %1593 = vmatpush1.msra.mxu0 %v1502
    %1594 = vmatprep.subr.mxu0 0.0
    %1595 = vmatpush1.msra.mxu0 0.0
    %1596 = vmatprep.subr.mxu0 0.0
    %1597 = vmatpush1.msra.mxu0 0.0
    %1598 = vmatprep.subr.mxu0 0.0
    %1599 = vmatpush1.msra.mxu0 0.0
    %1600 = vmatprep.subr.mxu0 0.0
    %1601 = vmatpush1.msra.mxu0 0.0
    %1602 = vmatprep.subr.mxu0 0.0
    %1603 = vmatpush1.msra.mxu0 0.0
    %1604 = vmatprep.subr.mxu0 0.0
    %1605 = vmatpush1.msra.mxu0 0.0
    %1606 = vmatprep.subr.mxu0 0.0
    %1607 = vmatpush1.msra.mxu0 0.0
    %1608 = vmatprep.subr.mxu0 0.0
    %1609 = vmatpush1.msra.mxu0 0.0
    %1610 = vmatprep.subr.mxu0 0.0
    %1611 = vmatpush1.msra.mxu0 0.0
    %1612 = vmatprep.subr.mxu0 0.0
    %1613 = vmatpush1.msra.mxu0 0.0
    %1614 = vmatprep.subr.mxu0 0.0
    %1615 = vmatpush1.msra.mxu0 0.0
    %1616 = vmatprep.subr.mxu0 0.0
    %1617 = vmatpush1.msra.mxu0 0.0
    %1618 = vmatprep.subr.mxu0 0.0
    %1619 = vmatpush1.msra.mxu0 0.0
    %1620 = vmatprep.subr.mxu0 0.0
    %1621 = vmatpush1.msra.mxu0 0.0
    %1622 = vmatprep.subr.mxu0 0.0
    %1623 = vmatpush1.msra.mxu0 0.0
    %1624 = vmatprep.subr.mxu0 0.0
    %1625 = vmatpush1.msra.mxu0 0.0
    %1626 = vmatprep.subr.mxu0 0.0
    %1627 = vmatpush1.msra.mxu0 0.0
    %1628 = vmatprep.subr.mxu0 0.0
    %1629 = vmatpush1.msra.mxu0 0.0
    %1630 = vmatprep.subr.mxu0 0.0
    %1631 = vmatpush1.msra.mxu0 0.0
    %1632 = vmatprep.subr.mxu0 0.0
    %1633 = vmatpush1.msra.mxu0 0.0
    %1634 = vmatprep.subr.mxu0 0.0
    %1635 = vmatpush1.msra.mxu0 0.0
    %1636 = vmatprep.subr.mxu0 0.0
    %1637 = vmatpush1.msra.mxu0 0.0
    %1638 = vmatprep.subr.mxu0 0.0
    %1639 = vmatpush1.msra.mxu0 0.0
    %1640 = vmatprep.subr.mxu0 0.0
    %1641 = vmatpush1.msra.mxu0 0.0
    %1642 = vmatprep.subr.mxu0 0.0
    %1643 = vmatpush1.msra.mxu0 0.0
    %1644 = vmatprep.subr.mxu0 0.0
    %1645 = vmatpush1.msra.mxu0 0.0
    %1646 = vmatprep.subr.mxu0 0.0
    %1647 = vmatpush1.msra.mxu0 0.0
    %1648 = vmatprep.subr.mxu0 0.0
    %1649 = vmatpush1.msra.mxu0 0.0
    %1650 = vmatprep.mubr.f32.mxu0 0.0
    %1651 = vmatmul.mubr.f32.gmra.mrb[0].mxu0 %v1584
    %v1652 = vpop.f32.mrb[0].mxu0
    %v1653 = vadd.f32 %v1580, %v1652
    %v1654 = vpop.f32.mrb[0].mxu0
    %1655 = vdwg.mxu0
    %v1656 = vld [vmem:[%s10] sm:$0x7]
    %v1657 = vlaneseq
    %v1658 = vshrl.u32 %v1657, 7
    %v1659 = vsub.s32 0, %v1658
    %v1660 = vrot.slane %v1656, %v1659
    %v1661 = vadd.f32 %v1653, %v1660
    %vm1662 = vcmask 523264
    %v1663 = vsel %vm1662, %v1661, 0.0
    %v1664 = vrot.slane %v1663, 4
    %v1665 = vadd.f32 %v1663, %v1664
    %v1666 = vrot.slane %v1665, 2
    %v1667 = vadd.f32 %v1665, %v1666
    %v1668 = vrot.slane %v1667, 1
    %v1669 = vadd.f32 %v1667, %v1668
    %v1670 = vrcp.pop 8.0
    %v1671 = vmul.f32 %v1669, %v1670
    %v1672 = vsub.f32 %v1661, %v1671
    %v1673 = vmul.f32 %v1672, %v1672
    %v1674 = vsel %vm1662, %v1673, 0.0
    %v1675 = vrot.slane %v1674, 4
    %v1676 = vadd.f32 %v1674, %v1675
    %v1677 = vrot.slane %v1676, 2
    %v1678 = vadd.f32 %v1676, %v1677
    %v1679 = vrot.slane %v1678, 1
    %v1680 = vadd.f32 %v1678, %v1679
    %v1681 = vmul.f32 %v1680, %v1670
    %v1682 = vadd.f32 %v1681, 1e-05
    %v1683 = vrsqrt.pop %v1682
    %v1684 = vmul.f32 %v1672, %v1683
    %v1685 = vlaneseq
    %v1686 = vshrl.u32 %v1685, 7
    %v1687 = vsub.s32 1, %v1686
    %v1688 = vrot.slane %v1656, %v1687
    %v1689 = vmul.f32 %v1688, %v1684
    %v1690 = vlaneseq
    %v1691 = vshrl.u32 %v1690, 7
    %v1692 = vsub.s32 2, %v1691
    %v1693 = vrot.slane %v1656, %v1692
    %v1694 = vadd.f32 %v1689, %v1693
    %v1695 = vmax.f32 %v1694, 0.0
    %1696 = vst.msk [vmem:[#allocation6] sm:$0xff] %vm1662, %v1695
    %v1697 = vld [vmem:[%s14] sm:$0x7]
    %v1698 = vld [vmem:[#allocation6] ss:$4 sm:$0x3]
    %v1699 = vld [vmem:[%s11] sm:$0xff]
    %v1700 = vld [vmem:[%s11 + $0x8] sm:$0xff]
    %v1701 = vld [vmem:[%s11 + $0x10] sm:$0xff]
    %v1702 = vld [vmem:[%s11 + $0x18] sm:$0xff]
    %v1703 = vld [vmem:[%s11 + $0x20] sm:$0xff]
    %v1704 = vld [vmem:[%s11 + $0x28] sm:$0xff]
    %v1705 = vld [vmem:[%s11 + $0x30] sm:$0xff]
    %v1706 = vld [vmem:[%s11 + $0x38] sm:$0xff]
    %s1707 = scalar_lea.vmem [#allocation6], 1
    %v1708 = vld [vmem:[%s1707] ss:$4 sm:$0x3]
    %s1709 = scalar_lea.vmem %s11, 64
    %v1710 = vld [vmem:[%s1709] sm:$0xff]
    %v1711 = vld [vmem:[%s1709 + $0x8] sm:$0xff]
    %v1712 = vld [vmem:[%s1709 + $0x10] sm:$0xff]
    %v1713 = vld [vmem:[%s1709 + $0x18] sm:$0xff]
    %v1714 = vld [vmem:[%s1709 + $0x20] sm:$0xff]
    %v1715 = vld [vmem:[%s1709 + $0x28] sm:$0xff]
    %v1716 = vld [vmem:[%s1709 + $0x30] sm:$0xff]
    %v1717 = vld [vmem:[%s1709 + $0x38] sm:$0xff]
    %v1719 = vsel %vm1662, %v1708, 0
    %1721 = vmatprep.subr.mxu0 0.0
    %1722 = vmatpush1.msra.mxu0 %v1710
    %1723 = vmatprep.subr.mxu0 0.0
    %1724 = vmatpush1.msra.mxu0 %v1711
    %1725 = vmatprep.subr.mxu0 0.0
    %1726 = vmatpush1.msra.mxu0 %v1712
    %1727 = vmatprep.subr.mxu0 0.0
    %1728 = vmatpush1.msra.mxu0 %v1713
    %1729 = vmatprep.subr.mxu0 0.0
    %1730 = vmatpush1.msra.mxu0 %v1714
    %1731 = vmatprep.subr.mxu0 0.0
    %1732 = vmatpush1.msra.mxu0 %v1715
    %1733 = vmatprep.subr.mxu0 0.0
    %1734 = vmatpush1.msra.mxu0 %v1716
    %1735 = vmatprep.subr.mxu0 0.0
    %1736 = vmatpush1.msra.mxu0 %v1717
    %1737 = vmatprep.subr.mxu0 0.0
    %1738 = vmatpush1.msra.mxu0 0.0
    %1739 = vmatprep.subr.mxu0 0.0
    %1740 = vmatpush1.msra.mxu0 0.0
    %1741 = vmatprep.subr.mxu0 0.0
    %1742 = vmatpush1.msra.mxu0 0.0
    %1743 = vmatprep.subr.mxu0 0.0
    %1744 = vmatpush1.msra.mxu0 0.0
    %1745 = vmatprep.subr.mxu0 0.0
    %1746 = vmatpush1.msra.mxu0 0.0
    %1747 = vmatprep.subr.mxu0 0.0
    %1748 = vmatpush1.msra.mxu0 0.0
    %1749 = vmatprep.subr.mxu0 0.0
    %1750 = vmatpush1.msra.mxu0 0.0
    %1751 = vmatprep.subr.mxu0 0.0
    %1752 = vmatpush1.msra.mxu0 0.0
    %1753 = vmatprep.subr.mxu0 0.0
    %1754 = vmatpush1.msra.mxu0 0.0
    %1755 = vmatprep.subr.mxu0 0.0
    %1756 = vmatpush1.msra.mxu0 0.0
    %1757 = vmatprep.subr.mxu0 0.0
    %1758 = vmatpush1.msra.mxu0 0.0
    %1759 = vmatprep.subr.mxu0 0.0
    %1760 = vmatpush1.msra.mxu0 0.0
    %1761 = vmatprep.subr.mxu0 0.0
    %1762 = vmatpush1.msra.mxu0 0.0
    %1763 = vmatprep.subr.mxu0 0.0
    %1764 = vmatpush1.msra.mxu0 0.0
    %1765 = vmatprep.subr.mxu0 0.0
    %1766 = vmatpush1.msra.mxu0 0.0
    %1767 = vmatprep.subr.mxu0 0.0
    %1768 = vmatpush1.msra.mxu0 0.0
    %1769 = vmatprep.subr.mxu0 0.0
    %1770 = vmatpush1.msra.mxu0 0.0
    %1771 = vmatprep.subr.mxu0 0.0
    %1772 = vmatpush1.msra.mxu0 0.0
    %1773 = vmatprep.subr.mxu0 0.0
    %1774 = vmatpush1.msra.mxu0 0.0
    %1775 = vmatprep.subr.mxu0 0.0
    %1776 = vmatpush1.msra.mxu0 0.0
    %1777 = vmatprep.subr.mxu0 0.0
    %1778 = vmatpush1.msra.mxu0 0.0
    %1779 = vmatprep.subr.mxu0 0.0
    %1780 = vmatpush1.msra.mxu0 0.0
    %1781 = vmatprep.subr.mxu0 0.0
    %1782 = vmatpush1.msra.mxu0 0.0
    %1783 = vmatprep.subr.mxu0 0.0
    %1784 = vmatpush1.msra.mxu0 0.0
    %1785 = vmatprep.mubr.f32.mxu0 0.0
    %1786 = vmatmul.mubr.f32.gmra.mrb[0].mxu0 %v1719
    %v1787 = vpop.f32.mrb[0].mxu0
    %v1788 = vadd.f32 0.0, %v1787
    %v1789 = vpop.f32.mrb[0].mxu0
    %1790 = vdwg.mxu0
    %v1792 = vsel %vm1662, %v1698, 0
    %1794 = vmatprep.subr.mxu0 0.0
    %1795 = vmatpush1.msra.mxu0 %v1699
    %1796 = vmatprep.subr.mxu0 0.0
    %1797 = vmatpush1.msra.mxu0 %v1700
    %1798 = vmatprep.subr.mxu0 0.0
    %1799 = vmatpush1.msra.mxu0 %v1701
    %1800 = vmatprep.subr.mxu0 0.0
    %1801 = vmatpush1.msra.mxu0 %v1702
    %1802 = vmatprep.subr.mxu0 0.0
    %1803 = vmatpush1.msra.mxu0 %v1703
    %1804 = vmatprep.subr.mxu0 0.0
    %1805 = vmatpush1.msra.mxu0 %v1704
    %1806 = vmatprep.subr.mxu0 0.0
    %1807 = vmatpush1.msra.mxu0 %v1705
    %1808 = vmatprep.subr.mxu0 0.0
    %1809 = vmatpush1.msra.mxu0 %v1706
    %1810 = vmatprep.subr.mxu0 0.0
    %1811 = vmatpush1.msra.mxu0 0.0
    %1812 = vmatprep.subr.mxu0 0.0
    %1813 = vmatpush1.msra.mxu0 0.0
    %1814 = vmatprep.subr.mxu0 0.0
    %1815 = vmatpush1.msra.mxu0 0.0
    %1816 = vmatprep.subr.mxu0 0.0
    %1817 = vmatpush1.msra.mxu0 0.0
    %1818 = vmatprep.subr.mxu0 0.0
    %1819 = vmatpush1.msra.mxu0 0.0
    %1820 = vmatprep.subr.mxu0 0.0
    %1821 = vmatpush1.msra.mxu0 0.0
    %1822 = vmatprep.subr.mxu0 0.0
    %1823 = vmatpush1.msra.mxu0 0.0
    %1824 = vmatprep.subr.mxu0 0.0
    %1825 = vmatpush1.msra.mxu0 0.0
    %1826 = vmatprep.subr.mxu0 0.0
    %1827 = vmatpush1.msra.mxu0 0.0
    %1828 = vmatprep.subr.mxu0 0.0
    %1829 = vmatpush1.msra.mxu0 0.0
    %1830 = vmatprep.subr.mxu0 0.0
    %1831 = vmatpush1.msra.mxu0 0.0
    %1832 = vmatprep.subr.mxu0 0.0
    %1833 = vmatpush1.msra.mxu0 0.0
    %1834 = vmatprep.subr.mxu0 0.0
    %1835 = vmatpush1.msra.mxu0 0.0
    %1836 = vmatprep.subr.mxu0 0.0
    %1837 = vmatpush1.msra.mxu0 0.0
    %1838 = vmatprep.subr.mxu0 0.0
    %1839 = vmatpush1.msra.mxu0 0.0
    %1840 = vmatprep.subr.mxu0 0.0
    %1841 = vmatpush1.msra.mxu0 0.0
    %1842 = vmatprep.subr.mxu0 0.0
    %1843 = vmatpush1.msra.mxu0 0.0
    %1844 = vmatprep.subr.mxu0 0.0
    %1845 = vmatpush1.msra.mxu0 0.0
    %1846 = vmatprep.subr.mxu0 0.0
    %1847 = vmatpush1.msra.mxu0 0.0
    %1848 = vmatprep.subr.mxu0 0.0
    %1849 = vmatpush1.msra.mxu0 0.0
    %1850 = vmatprep.subr.mxu0 0.0
    %1851 = vmatpush1.msra.mxu0 0.0
    %1852 = vmatprep.subr.mxu0 0.0
    %1853 = vmatpush1.msra.mxu0 0.0
    %1854 = vmatprep.subr.mxu0 0.0
    %1855 = vmatpush1.msra.mxu0 0.0
    %1856 = vmatprep.subr.mxu0 0.0
    %1857 = vmatpush1.msra.mxu0 0.0
    %1858 = vmatprep.mubr.f32.mxu0 0.0
    %1859 = vmatmul.mubr.f32.gmra.mrb[0].mxu0 %v1792
    %v1860 = vpop.f32.mrb[0].mxu0
    %v1861 = vadd.f32 %v1788, %v1860
    %v1862 = vpop.f32.mrb[0].mxu0
    %1863 = vdwg.mxu0
    %s1864 = scalar_lea.vmem [#allocation6], 2
    %v1865 = vld [vmem:[%s1864] ss:$4 sm:$0x3]
    %s1866 = scalar_lea.vmem %s11, 128
    %v1867 = vld [vmem:[%s1866] sm:$0xff]
    %v1868 = vld [vmem:[%s1866 + $0x8] sm:$0xff]
    %v1869 = vld [vmem:[%s1866 + $0x10] sm:$0xff]
    %v1870 = vld [vmem:[%s1866 + $0x18] sm:$0xff]
    %v1871 = vld [vmem:[%s1866 + $0x20] sm:$0xff]
    %v1872 = vld [vmem:[%s1866 + $0x28] sm:$0xff]
    %v1873 = vld [vmem:[%s1866 + $0x30] sm:$0xff]
    %v1874 = vld [vmem:[%s1866 + $0x38] sm:$0xff]
    %v1876 = vsel %vm1662, %v1865, 0
    %1878 = vmatprep.subr.mxu0 0.0
    %1879 = vmatpush1.msra.mxu0 %v1867
    %1880 = vmatprep.subr.mxu0 0.0
    %1881 = vmatpush1.msra.mxu0 %v1868
    %1882 = vmatprep.subr.mxu0 0.0
    %1883 = vmatpush1.msra.mxu0 %v1869
    %1884 = vmatprep.subr.mxu0 0.0
    %1885 = vmatpush1.msra.mxu0 %v1870
    %1886 = vmatprep.subr.mxu0 0.0
    %1887 = vmatpush1.msra.mxu0 %v1871
    %1888 = vmatprep.subr.mxu0 0.0
    %1889 = vmatpush1.msra.mxu0 %v1872
    %1890 = vmatprep.subr.mxu0 0.0
    %1891 = vmatpush1.msra.mxu0 %v1873
    %1892 = vmatprep.subr.mxu0 0.0
    %1893 = vmatpush1.msra.mxu0 %v1874
    %1894 = vmatprep.subr.mxu0 0.0
    %1895 = vmatpush1.msra.mxu0 0.0
    %1896 = vmatprep.subr.mxu0 0.0
    %1897 = vmatpush1.msra.mxu0 0.0
    %1898 = vmatprep.subr.mxu0 0.0
    %1899 = vmatpush1.msra.mxu0 0.0
    %1900 = vmatprep.subr.mxu0 0.0
    %1901 = vmatpush1.msra.mxu0 0.0
    %1902 = vmatprep.subr.mxu0 0.0
    %1903 = vmatpush1.msra.mxu0 0.0
    %1904 = vmatprep.subr.mxu0 0.0
    %1905 = vmatpush1.msra.mxu0 0.0
    %1906 = vmatprep.subr.mxu0 0.0
    %1907 = vmatpush1.msra.mxu0 0.0
    %1908 = vmatprep.subr.mxu0 0.0
    %1909 = vmatpush1.msra.mxu0 0.0
    %1910 = vmatprep.subr.mxu0 0.0
    %1911 = vmatpush1.msra.mxu0 0.0
    %1912 = vmatprep.subr.mxu0 0.0
    %1913 = vmatpush1.msra.mxu0 0.0
    %1914 = vmatprep.subr.mxu0 0.0
    %1915 = vmatpush1.msra.mxu0 0.0
    %1916 = vmatprep.subr.mxu0 0.0
    %1917 = vmatpush1.msra.mxu0 0.0
    %1918 = vmatprep.subr.mxu0 0.0
    %1919 = vmatpush1.msra.mxu0 0.0
    %1920 = vmatprep.subr.mxu0 0.0
    %1921 = vmatpush1.msra.mxu0 0.0
    %1922 = vmatprep.subr.mxu0 0.0
    %1923 = vmatpush1.msra.mxu0 0.0
    %1924 = vmatprep.subr.mxu0 0.0
    %1925 = vmatpush1.msra.mxu0 0.0
    %1926 = vmatprep.subr.mxu0 0.0
    %1927 = vmatpush1.msra.mxu0 0.0
    %1928 = vmatprep.subr.mxu0 0.0
    %1929 = vmatpush1.msra.mxu0 0.0
    %1930 = vmatprep.subr.mxu0 0.0
    %1931 = vmatpush1.msra.mxu0 0.0
    %1932 = vmatprep.subr.mxu0 0.0
    %1933 = vmatpush1.msra.mxu0 0.0
    %1934 = vmatprep.subr.mxu0 0.0
    %1935 = vmatpush1.msra.mxu0 0.0
    %1936 = vmatprep.subr.mxu0 0.0
    %1937 = vmatpush1.msra.mxu0 0.0
    %1938 = vmatprep.subr.mxu0 0.0
    %1939 = vmatpush1.msra.mxu0 0.0
    %1940 = vmatprep.subr.mxu0 0.0
    %1941 = vmatpush1.msra.mxu0 0.0
    %1942 = vmatprep.mubr.f32.mxu0 0.0
    %1943 = vmatmul.mubr.f32.gmra.mrb[0].mxu0 %v1876
    %v1944 = vpop.f32.mrb[0].mxu0
    %v1945 = vadd.f32 0.0, %v1944
    %v1946 = vpop.f32.mrb[0].mxu0
    %1947 = vdwg.mxu0
    %v1948 = vadd.f32 %v1861, %v1945
    %s1949 = scalar_lea.vmem [#allocation6], 3
    %v1950 = vld [vmem:[%s1949] ss:$4 sm:$0x3]
    %s1951 = scalar_lea.vmem %s11, 192
    %v1952 = vld [vmem:[%s1951] sm:$0xff]
    %v1953 = vld [vmem:[%s1951 + $0x8] sm:$0xff]
    %v1954 = vld [vmem:[%s1951 + $0x10] sm:$0xff]
    %v1955 = vld [vmem:[%s1951 + $0x18] sm:$0xff]
    %v1956 = vld [vmem:[%s1951 + $0x20] sm:$0xff]
    %v1957 = vld [vmem:[%s1951 + $0x28] sm:$0xff]
    %v1958 = vld [vmem:[%s1951 + $0x30] sm:$0xff]
    %v1959 = vld [vmem:[%s1951 + $0x38] sm:$0xff]
    %v1961 = vsel %vm1662, %v1950, 0
    %1963 = vmatprep.subr.mxu0 0.0
    %1964 = vmatpush1.msra.mxu0 %v1952
    %1965 = vmatprep.subr.mxu0 0.0
    %1966 = vmatpush1.msra.mxu0 %v1953
    %1967 = vmatprep.subr.mxu0 0.0
    %1968 = vmatpush1.msra.mxu0 %v1954
    %1969 = vmatprep.subr.mxu0 0.0
    %1970 = vmatpush1.msra.mxu0 %v1955
    %1971 = vmatprep.subr.mxu0 0.0
    %1972 = vmatpush1.msra.mxu0 %v1956
    %1973 = vmatprep.subr.mxu0 0.0
    %1974 = vmatpush1.msra.mxu0 %v1957
    %1975 = vmatprep.subr.mxu0 0.0
    %1976 = vmatpush1.msra.mxu0 %v1958
    %1977 = vmatprep.subr.mxu0 0.0
    %1978 = vmatpush1.msra.mxu0 %v1959
    %1979 = vmatprep.subr.mxu0 0.0
    %1980 = vmatpush1.msra.mxu0 0.0
    %1981 = vmatprep.subr.mxu0 0.0
    %1982 = vmatpush1.msra.mxu0 0.0
    %1983 = vmatprep.subr.mxu0 0.0
    %1984 = vmatpush1.msra.mxu0 0.0
    %1985 = vmatprep.subr.mxu0 0.0
    %1986 = vmatpush1.msra.mxu0 0.0
    %1987 = vmatprep.subr.mxu0 0.0
    %1988 = vmatpush1.msra.mxu0 0.0
    %1989 = vmatprep.subr.mxu0 0.0
    %1990 = vmatpush1.msra.mxu0 0.0
    %1991 = vmatprep.subr.mxu0 0.0
    %1992 = vmatpush1.msra.mxu0 0.0
    %1993 = vmatprep.subr.mxu0 0.0
    %1994 = vmatpush1.msra.mxu0 0.0
    %1995 = vmatprep.subr.mxu0 0.0
    %1996 = vmatpush1.msra.mxu0 0.0
    %1997 = vmatprep.subr.mxu0 0.0
    %1998 = vmatpush1.msra.mxu0 0.0
    %1999 = vmatprep.subr.mxu0 0.0
    %2000 = vmatpush1.msra.mxu0 0.0
    %2001 = vmatprep.subr.mxu0 0.0
    %2002 = vmatpush1.msra.mxu0 0.0
    %2003 = vmatprep.subr.mxu0 0.0
    %2004 = vmatpush1.msra.mxu0 0.0
    %2005 = vmatprep.subr.mxu0 0.0
    %2006 = vmatpush1.msra.mxu0 0.0
    %2007 = vmatprep.subr.mxu0 0.0
    %2008 = vmatpush1.msra.mxu0 0.0
    %2009 = vmatprep.subr.mxu0 0.0
    %2010 = vmatpush1.msra.mxu0 0.0
    %2011 = vmatprep.subr.mxu0 0.0
    %2012 = vmatpush1.msra.mxu0 0.0
    %2013 = vmatprep.subr.mxu0 0.0
    %2014 = vmatpush1.msra.mxu0 0.0
    %2015 = vmatprep.subr.mxu0 0.0
    %2016 = vmatpush1.msra.mxu0 0.0
    %2017 = vmatprep.subr.mxu0 0.0
    %2018 = vmatpush1.msra.mxu0 0.0
    %2019 = vmatprep.subr.mxu0 0.0
    %2020 = vmatpush1.msra.mxu0 0.0
    %2021 = vmatprep.subr.mxu0 0.0
    %2022 = vmatpush1.msra.mxu0 0.0
    %2023 = vmatprep.subr.mxu0 0.0
    %2024 = vmatpush1.msra.mxu0 0.0
    %2025 = vmatprep.subr.mxu0 0.0
    %2026 = vmatpush1.msra.mxu0 0.0
    %2027 = vmatprep.mubr.f32.mxu0 0.0
    %2028 = vmatmul.mubr.f32.gmra.mrb[0].mxu0 %v1961
    %v2029 = vpop.f32.mrb[0].mxu0
    %v2030 = vadd.f32 0.0, %v2029
    %v2031 = vpop.f32.mrb[0].mxu0
    %2032 = vdwg.mxu0
    %v2033 = vadd.f32 %v1948, %v2030
    %v2034 = vlaneseq
    %v2035 = vshrl.u32 %v2034, 7
    %v2036 = vsub.s32 0, %v2035
    %v2037 = vrot.slane %v1697, %v2036
    %v2038 = vadd.f32 %v2033, %v2037
    %v2039 = vmax.f32 %v2038, 0.0
    %v2040 = vld [vmem:[%s12] sm:$0xff]
    %v2041 = vld [vmem:[%s12 + $0x8] sm:$0xff]
    %v2042 = vld [vmem:[%s12 + $0x10] sm:$0xff]
    %v2043 = vld [vmem:[%s12 + $0x18] sm:$0xff]
    %v2044 = vlaneseq
    %v2045 = vshrl.u32 %v2044, 7
    %v2046 = vsub.s32 1, %v2045
    %v2047 = vrot.slane %v1697, %v2046
    %v2049 = vsel %vm1452, %v2039, 0
    %2051 = vmatprep.subr.mxu0 0.0
    %2052 = vmatpush1.msra.mxu0 %v2040
    %2053 = vmatprep.subr.mxu0 0.0
    %2054 = vmatpush1.msra.mxu0 %v2041
    %2055 = vmatprep.subr.mxu0 0.0
    %2056 = vmatpush1.msra.mxu0 %v2042
    %2057 = vmatprep.subr.mxu0 0.0
    %2058 = vmatpush1.msra.mxu0 %v2043
    %2059 = vmatprep.subr.mxu0 0.0
    %2060 = vmatpush1.msra.mxu0 0.0
    %2061 = vmatprep.subr.mxu0 0.0
    %2062 = vmatpush1.msra.mxu0 0.0
    %2063 = vmatprep.subr.mxu0 0.0
    %2064 = vmatpush1.msra.mxu0 0.0
    %2065 = vmatprep.subr.mxu0 0.0
    %2066 = vmatpush1.msra.mxu0 0.0
    %2067 = vmatprep.subr.mxu0 0.0
    %2068 = vmatpush1.msra.mxu0 0.0
    %2069 = vmatprep.subr.mxu0 0.0
    %2070 = vmatpush1.msra.mxu0 0.0
    %2071 = vmatprep.subr.mxu0 0.0
    %2072 = vmatpush1.msra.mxu0 0.0
    %2073 = vmatprep.subr.mxu0 0.0
    %2074 = vmatpush1.msra.mxu0 0.0
    %2075 = vmatprep.subr.mxu0 0.0
    %2076 = vmatpush1.msra.mxu0 0.0
    %2077 = vmatprep.subr.mxu0 0.0
    %2078 = vmatpush1.msra.mxu0 0.0
    %2079 = vmatprep.subr.mxu0 0.0
    %2080 = vmatpush1.msra.mxu0 0.0
    %2081 = vmatprep.subr.mxu0 0.0
    %2082 = vmatpush1.msra.mxu0 0.0
    %2083 = vmatprep.subr.mxu0 0.0
    %2084 = vmatpush1.msra.mxu0 0.0
    %2085 = vmatprep.subr.mxu0 0.0
    %2086 = vmatpush1.msra.mxu0 0.0
    %2087 = vmatprep.subr.mxu0 0.0
    %2088 = vmatpush1.msra.mxu0 0.0
    %2089 = vmatprep.subr.mxu0 0.0
    %2090 = vmatpush1.msra.mxu0 0.0
    %2091 = vmatprep.subr.mxu0 0.0
    %2092 = vmatpush1.msra.mxu0 0.0
    %2093 = vmatprep.subr.mxu0 0.0
    %2094 = vmatpush1.msra.mxu0 0.0
    %2095 = vmatprep.subr.mxu0 0.0
    %2096 = vmatpush1.msra.mxu0 0.0
    %2097 = vmatprep.subr.mxu0 0.0
    %2098 = vmatpush1.msra.mxu0 0.0
    %2099 = vmatprep.subr.mxu0 0.0
    %2100 = vmatpush1.msra.mxu0 0.0
    %2101 = vmatprep.subr.mxu0 0.0
    %2102 = vmatpush1.msra.mxu0 0.0
    %2103 = vmatprep.subr.mxu0 0.0
    %2104 = vmatpush1.msra.mxu0 0.0
    %2105 = vmatprep.subr.mxu0 0.0
    %2106 = vmatpush1.msra.mxu0 0.0
    %2107 = vmatprep.subr.mxu0 0.0
    %2108 = vmatpush1.msra.mxu0 0.0
    %2109 = vmatprep.subr.mxu0 0.0
    %2110 = vmatpush1.msra.mxu0 0.0
    %2111 = vmatprep.subr.mxu0 0.0
    %2112 = vmatpush1.msra.mxu0 0.0
    %2113 = vmatprep.subr.mxu0 0.0
    %2114 = vmatpush1.msra.mxu0 0.0
    %2115 = vmatprep.mubr.f32.mxu0 0.0
    %2116 = vmatmul.mubr.f32.gmra.mrb[0].mxu0 %v2049
    %v2117 = vpop.f32.mrb[0].mxu0
    %v2118 = vadd.f32 %v2047, %v2117
    %v2119 = vpop.f32.mrb[0].mxu0
    %2120 = vdwg.mxu0
    %v2121 = vmax.f32 %v2118, 0.0
    %v2122 = vld [vmem:[%s13] sm:$0xff]
    %v2123 = vld [vmem:[%s13 + $0x8] sm:$0xff]
    %v2124 = vlaneseq
    %v2125 = vshrl.u32 %v2124, 7
    %v2126 = vsub.s32 2, %v2125
    %v2127 = vrot.slane %v1697, %v2126
    %v2129 = vsel %vm1203, %v2121, 0
    %2131 = vmatprep.subr.mxu0 0.0
    %2132 = vmatpush1.msra.mxu0 %v2122
    %2133 = vmatprep.subr.mxu0 0.0
    %2134 = vmatpush1.msra.mxu0 %v2123
    %2135 = vmatprep.subr.mxu0 0.0
    %2136 = vmatpush1.msra.mxu0 0.0
    %2137 = vmatprep.subr.mxu0 0.0
    %2138 = vmatpush1.msra.mxu0 0.0
    %2139 = vmatprep.subr.mxu0 0.0
    %2140 = vmatpush1.msra.mxu0 0.0
    %2141 = vmatprep.subr.mxu0 0.0
    %2142 = vmatpush1.msra.mxu0 0.0
    %2143 = vmatprep.subr.mxu0 0.0
    %2144 = vmatpush1.msra.mxu0 0.0
    %2145 = vmatprep.subr.mxu0 0.0
    %2146 = vmatpush1.msra.mxu0 0.0
    %2147 = vmatprep.subr.mxu0 0.0
    %2148 = vmatpush1.msra.mxu0 0.0
    %2149 = vmatprep.subr.mxu0 0.0
    %2150 = vmatpush1.msra.mxu0 0.0
    %2151 = vmatprep.subr.mxu0 0.0
    %2152 = vmatpush1.msra.mxu0 0.0
    %2153 = vmatprep.subr.mxu0 0.0
    %2154 = vmatpush1.msra.mxu0 0.0
    %2155 = vmatprep.subr.mxu0 0.0
    %2156 = vmatpush1.msra.mxu0 0.0
    %2157 = vmatprep.subr.mxu0 0.0
    %2158 = vmatpush1.msra.mxu0 0.0
    %2159 = vmatprep.subr.mxu0 0.0
    %2160 = vmatpush1.msra.mxu0 0.0
    %2161 = vmatprep.subr.mxu0 0.0
    %2162 = vmatpush1.msra.mxu0 0.0
    %2163 = vmatprep.subr.mxu0 0.0
    %2164 = vmatpush1.msra.mxu0 0.0
    %2165 = vmatprep.subr.mxu0 0.0
    %2166 = vmatpush1.msra.mxu0 0.0
    %2167 = vmatprep.subr.mxu0 0.0
    %2168 = vmatpush1.msra.mxu0 0.0
    %2169 = vmatprep.subr.mxu0 0.0
    %2170 = vmatpush1.msra.mxu0 0.0
    %2171 = vmatprep.subr.mxu0 0.0
    %2172 = vmatpush1.msra.mxu0 0.0
    %2173 = vmatprep.subr.mxu0 0.0
    %2174 = vmatpush1.msra.mxu0 0.0
    %2175 = vmatprep.subr.mxu0 0.0
    %2176 = vmatpush1.msra.mxu0 0.0
    %2177 = vmatprep.subr.mxu0 0.0
    %2178 = vmatpush1.msra.mxu0 0.0
    %2179 = vmatprep.subr.mxu0 0.0
    %2180 = vmatpush1.msra.mxu0 0.0
    %2181 = vmatprep.subr.mxu0 0.0
    %2182 = vmatpush1.msra.mxu0 0.0
    %2183 = vmatprep.subr.mxu0 0.0
    %2184 = vmatpush1.msra.mxu0 0.0
    %2185 = vmatprep.subr.mxu0 0.0
    %2186 = vmatpush1.msra.mxu0 0.0
    %2187 = vmatprep.subr.mxu0 0.0
    %2188 = vmatpush1.msra.mxu0 0.0
    %2189 = vmatprep.subr.mxu0 0.0
    %2190 = vmatpush1.msra.mxu0 0.0
    %2191 = vmatprep.subr.mxu0 0.0
    %2192 = vmatpush1.msra.mxu0 0.0
    %2193 = vmatprep.subr.mxu0 0.0
    %2194 = vmatpush1.msra.mxu0 0.0
    %2195 = vmatprep.mubr.f32.mxu0 0.0
    %2196 = vmatmul.mubr.f32.gmra.mrb[0].mxu0 %v2129
    %v2197 = vpop.f32.mrb[0].mxu0
    %v2198 = vadd.f32 %v2127, %v2197
    %v2199 = vpop.f32.mrb[0].mxu0
    %2200 = vdwg.mxu0
    %vm2201 = vcmask 9216
    %2202 = vst.msk [vmem:[#allocation7] sm:$0x3] %vm2201, %v2198
    // Predicated region
    $region62: #{convnet_forward.1} parent=1 // pred_check
      _
    $region63: #{convnet_forward.1} parent=1 // pred_check_branch
      %2204 = sbr.rel (0) target = $region65
    $region64: #{convnet_forward.1} parent=1 // pred_region
      %s2206 = ssub.s32 32, 32
      %2207 = vsyncadd [#allocation8], %s2206
      %s2209 = sshll.u32 [#allocation7], 4
      %s2210 = int_to_ptr.vmem [resolvable:$true] %s2209
      %2212 = dma.vmem_to_hbm [thread:$0]  %s2210, 32, %s15, [#allocation8]
    $region65: #{convnet_forward.1} parent=1 // pred_fallthru
      _
    // Predicated region
    $region66: #{convnet_forward.1} parent=1 // pred_check
      _
    $region67: #{convnet_forward.1} parent=1 // pred_check_branch
      %2214 = sbr.rel (0) target = $region69
    $region68: #{convnet_forward.1} parent=1 // pred_region
      %2215 = dma.done [#allocation8], 32
    $region69: #{convnet_forward.1} parent=1 // pred_fallthru
      _
    %2216 = vsyncpa [#allocation8], 1

</llo_original>
